<compile_context>
chip_gen: v7x
topology: tpu7x:2x2x1
jax: 0.10.0
libtpu: 0.0.40
codegen_flags: <defaults>
</compile_context>

<pallas_src>
import jax
import jax.numpy as jnp
from jax.experimental import pallas as pl
from jax.experimental.pallas import tpu as pltpu

IN_DIM = 1024
HID_DIM = 256
OUT_DIM = 981
OUT_PAD = 1024          # class dim padded to a multiple of 128 lanes
NEG_BIG = -1e30         # bias for padded class lanes -> exp underflows to 0, never wins max
MASKED = -3.0e38        # value written over already-picked lanes during the top-5 sweep
TOP_K = 5


def _round_up(x, m):
    return (x + m - 1) // m * m


def _choose_tb(B):
    """Batch-tile size.

    Big batches: large tiles (amortize the ~0.35us per-grid-step overhead) with >=2
    grid steps so v7x's second TensorCore gets work.  Medium batches: an exact 2-way
    split when it avoids any pad copy.  Small batches: a single tile rounded to a
    sublane multiple.  Capped at 512 to stay inside v5e's scoped-VMEM budget.
    """
    if B >= 1024:
        return 512
    if B >= 512:
        return 256
    half = _round_up((B + 1) // 2, 8)
    if B >= 64 and 2 * half == B:        # even split, no padding, 2 grid steps
        return half
    return _round_up(max(B, 1), 8)       # single tile (pads at most 7 rows)


def spotter_kernel(x_ref, w1_ref, b1_ref, w2_ref, b2_ref, w3_ref, b3_ref, tgt_ref,
                   nll_ref, topk_ref):
    # feats arrive as f32 (single HBM pass); cast to bf16 on the VPU for the MXU.
    x = x_ref[...].astype(jnp.bfloat16)                               # (TB, 1024)

    # MLP: Linear -> ReLU -> Linear -> ReLU -> Linear (bf16 operands, f32 MXU accum).
    h1 = jnp.dot(x, w1_ref[...], preferred_element_type=jnp.float32) + b1_ref[...]
    h1 = jnp.maximum(h1, 0.0).astype(jnp.bfloat16)
    h2 = jnp.dot(h1, w2_ref[...], preferred_element_type=jnp.float32) + b2_ref[...]
    h2 = jnp.maximum(h2, 0.0).astype(jnp.bfloat16)
    logits = jnp.dot(h2, w3_ref[...], preferred_element_type=jnp.float32) + b3_ref[...]
    # (TB, OUT_PAD) f32; padded class lanes carry bias -1e30 and never matter.

    col = jax.lax.broadcasted_iota(jnp.int32, logits.shape, 1)        # class index per lane

    # Cross-entropy per row (log-sum-exp; padded lanes underflow to 0 in the exp).
    m = jnp.max(logits, axis=1, keepdims=True)                        # (TB, 1)
    lse = m + jnp.log(jnp.sum(jnp.exp(logits - m), axis=1, keepdims=True))
    tgt = tgt_ref[...]                                                # (TB, 1) int32, < OUT_DIM
    picked = jnp.sum(jnp.where(col == tgt, logits, 0.0), axis=1, keepdims=True)
    nll_ref[...] = lse - picked                                       # per-row NLL

    # Top-5 class indices, computed on the f32 logits tile already in VMEM:
    # 5 passes of (max, lowest-index-argmax, mask-out).  Lower index wins ties,
    # matching lax.top_k; padded lanes (-1e30) can never be selected.
    idxs = []
    cur = logits
    for _ in range(TOP_K):
        mj = jnp.max(cur, axis=1, keepdims=True)
        idx = jnp.min(jnp.where(cur == mj, col, OUT_PAD), axis=1, keepdims=True)
        idxs.append(idx)
        cur = jnp.where(col == idx, jnp.float32(MASKED), cur)

    # Assemble the (TB, 5) index tile with lane-broadcast selects (single store).
    col5 = jax.lax.broadcasted_iota(jnp.int32, topk_ref.shape, 1)
    topk = jnp.zeros(topk_ref.shape, jnp.int32)
    for j in range(TOP_K):
        topk = jnp.where(col5 == j, idxs[j], topk)
    topk_ref[...] = topk


def prepare_params(params):
    """One-time prep: pad the last Linear to 1024 output lanes and cast weights to bf16."""
    w1, b1, w2, b2, w3, b3 = params
    w3p = jnp.pad(w3, ((0, 0), (0, OUT_PAD - OUT_DIM)))
    b3p = jnp.pad(b3, ((0, 0), (0, OUT_PAD - OUT_DIM)), constant_values=NEG_BIG)
    return (w1.astype(jnp.bfloat16), b1.astype(jnp.float32),
            w2.astype(jnp.bfloat16), b2.astype(jnp.float32),
            w3p.astype(jnp.bfloat16), b3p.astype(jnp.float32))


def spotter_forward(feats, txt_idx, prep):
    """feats: (B, 1024) float, txt_idx: (B,) int. Returns dict(loss, topk)."""
    B = feats.shape[0]
    w1, b1, w2, b2, w3p, b3p = prep

    TB = _choose_tb(B)
    B_pad = _round_up(B, TB)
    grid = (B_pad // TB,)

    x = feats.astype(jnp.float32)                 # bf16 cast happens inside the kernel
    tgt = txt_idx.astype(jnp.int32).reshape(-1, 1)
    if B_pad != B:                                # only for awkward batch sizes
        x = jnp.pad(x, ((0, B_pad - B), (0, 0)))
        tgt = jnp.pad(tgt, ((0, B_pad - B), (0, 0)))

    const = lambda shape: pl.BlockSpec(shape, lambda i: (0,) * len(shape))
    batched = lambda shape: pl.BlockSpec(shape, lambda i: (i,) + (0,) * (len(shape) - 1))

    nll, topk_pad = pl.pallas_call(
        spotter_kernel,
        grid=grid,
        in_specs=[
            batched((TB, IN_DIM)),                                     # feats tile (f32)
            const((IN_DIM, HID_DIM)), const((1, HID_DIM)),             # W1, b1 (resident)
            const((HID_DIM, HID_DIM)), const((1, HID_DIM)),            # W2, b2 (resident)
            const((HID_DIM, OUT_PAD)), const((1, OUT_PAD)),            # W3, b3 (resident)
            batched((TB, 1)),                                          # targets tile
        ],
        out_specs=[
            batched((TB, 1)),                                          # per-row NLL
            batched((TB, TOP_K)),                                      # top-5 indices
        ],
        out_shape=(
            jax.ShapeDtypeStruct((B_pad, 1), jnp.float32),
            jax.ShapeDtypeStruct((B_pad, TOP_K), jnp.int32),
        ),
        compiler_params=pltpu.CompilerParams(
            dimension_semantics=("parallel",),                         # shard tiles across TCs
            vmem_limit_bytes=32 * 1024 * 1024),                        # room for TB=512 on v5e too
    )(x, w1, b1, w2, b2, w3p, b3p, tgt)

    loss = jnp.mean(nll[:B, 0])                                        # mean over real rows only
    topk = topk_pad[:B]
    return {"loss": loss, "topk": topk}


def init_params(key):
    """Deterministic init matching nn.Linear shapes: U(-1/sqrt(fan_in), 1/sqrt(fan_in))."""
    keys = jax.random.split(key, 6)

    def linear(kw, kb, fan_in, fan_out):
        bound = 1.0 / jnp.sqrt(fan_in)
        w = jax.random.uniform(kw, (fan_in, fan_out), jnp.float32, -bound, bound)
        b = jax.random.uniform(kb, (1, fan_out), jnp.float32, -bound, bound)
        return w, b

    w1, b1 = linear(keys[0], keys[1], IN_DIM, HID_DIM)
    w2, b2 = linear(keys[2], keys[3], HID_DIM, HID_DIM)
    w3, b3 = linear(keys[4], keys[5], HID_DIM, OUT_DIM)
    return (w1, b1, w2, b2, w3, b3)


if __name__ == "__main__":
    key = jax.random.PRNGKey(0)
    k_param, k_feat, k_tgt = jax.random.split(key, 3)

    B = 8  # small batch for the sanity run
    params = init_params(k_param)
    prep = prepare_params(params)                      # one-time pad + bf16 cast
    feats = jax.random.normal(k_feat, (B, IN_DIM), jnp.float32)
    txt_idx = jax.random.randint(k_tgt, (B,), 0, OUT_DIM, jnp.int32)

    fwd = jax.jit(spotter_forward)
    out = fwd(feats, txt_idx, prep)
    jax.block_until_ready(out["loss"])
    jax.block_until_ready(out["topk"])

    # Pure-JAX reference using the same bf16 operand rounding (f32 accumulation).
    w1, b1, w2, b2, w3, b3 = params

    def bdot(a, w):
        return jnp.dot(a.astype(jnp.bfloat16), w.astype(jnp.bfloat16),
                       preferred_element_type=jnp.float32)

    h = jnp.maximum(bdot(feats, w1) + b1, 0.0)
    h = jnp.maximum(bdot(h, w2) + b2, 0.0)
    ref_logits = bdot(h, w3) + b3
    ref_loss = jnp.mean(
        jax.nn.logsumexp(ref_logits, axis=1)
        - jnp.take_along_axis(ref_logits, txt_idx[:, None], axis=1)[:, 0])
    ref_topk = jax.lax.top_k(ref_logits, 5)[1]

    assert jnp.allclose(out["loss"], ref_loss, rtol=1e-3, atol=1e-3), (out["loss"], ref_loss)
    assert jnp.array_equal(out["topk"], ref_topk), (out["topk"], ref_topk)

    print("KERNEL_OK")
</pallas_src>

<mosaic_0001>
module attributes {stable_mosaic.version = 11 : i64} {
  func.func @spotter_kernel(%arg0: i32, %arg1: memref<8x1024xf32, #tpu.memory_space<vmem>>, %arg2: memref<1024x256xbf16, #tpu.memory_space<vmem>>, %arg3: memref<1x256xf32, #tpu.memory_space<vmem>>, %arg4: memref<256x256xbf16, #tpu.memory_space<vmem>>, %arg5: memref<1x256xf32, #tpu.memory_space<vmem>>, %arg6: memref<256x1024xbf16, #tpu.memory_space<vmem>>, %arg7: memref<1x1024xf32, #tpu.memory_space<vmem>>, %arg8: memref<8x1xi32, #tpu.memory_space<vmem>>, %arg9: memref<8x1xf32, #tpu.memory_space<vmem>>, %arg10: memref<8x5xi32, #tpu.memory_space<vmem>>) attributes {dimension_semantics = [#tpu.dimension_semantics<parallel>], iteration_bounds = array<i64: 1>, scalar_prefetch = 0 : i64, scratch_operands = 0 : i64, tpu.core_type = #tpu.core_type<tc>, window_params = [{transform_indices = @transform_0, window_bounds = array<i64: 8, 1024>}, {pipeline_mode = #tpu.pipeline_mode<synchronous>, transform_indices = @transform_1, window_bounds = array<i64: 1024, 256>}, {pipeline_mode = #tpu.pipeline_mode<synchronous>, transform_indices = @transform_2, window_bounds = array<i64: 1, 256>}, {pipeline_mode = #tpu.pipeline_mode<synchronous>, transform_indices = @transform_3, window_bounds = array<i64: 256, 256>}, {pipeline_mode = #tpu.pipeline_mode<synchronous>, transform_indices = @transform_4, window_bounds = array<i64: 1, 256>}, {pipeline_mode = #tpu.pipeline_mode<synchronous>, transform_indices = @transform_5, window_bounds = array<i64: 256, 1024>}, {pipeline_mode = #tpu.pipeline_mode<synchronous>, transform_indices = @transform_6, window_bounds = array<i64: 1, 1024>}, {transform_indices = @transform_7, window_bounds = array<i64: 8, 1>}, {transform_indices = @transform_8, window_bounds = array<i64: 8, 1>}, {transform_indices = @transform_9, window_bounds = array<i64: 8, 5>}]} {
    %c0 = arith.constant 0 : index
    %c0_0 = arith.constant 0 : index
    %0 = vector.load %arg1[%c0, %c0_0] : memref<8x1024xf32, #tpu.memory_space<vmem>>, vector<8x1024xf32>
    %1 = arith.truncf %0 : vector<8x1024xf32> to vector<8x1024xbf16>
    %c0_1 = arith.constant 0 : index
    %c0_2 = arith.constant 0 : index
    %2 = vector.load %arg2[%c0_1, %c0_2] : memref<1024x256xbf16, #tpu.memory_space<vmem>>, vector<1024x256xbf16>
    %cst = arith.constant dense<0.000000e+00> : vector<8x256xf32>
    %3 = tpu.matmul %1, %2, %cst {dimension_numbers = #tpu.dot_dimension_numbers<[1], [0], [0], [1], [0, 0, 1, 1], [], []>} : vector<8x1024xbf16>, vector<1024x256xbf16>, vector<8x256xf32> -> vector<8x256xf32>
    %c0_3 = arith.constant 0 : index
    %c0_4 = arith.constant 0 : index
    %4 = vector.load %arg3[%c0_3, %c0_4] : memref<1x256xf32, #tpu.memory_space<vmem>>, vector<1x256xf32>
    %5 = vector.broadcast %4 : vector<1x256xf32> to vector<8x256xf32>
    %6 = arith.addf %3, %5 : vector<8x256xf32>
    %cst_5 = arith.constant 0.000000e+00 : f32
    %7 = vector.broadcast %cst_5 : f32 to vector<8x256xf32>
    %8 = arith.maximumf %6, %7 : vector<8x256xf32>
    %9 = arith.truncf %8 : vector<8x256xf32> to vector<8x256xbf16>
    %c0_6 = arith.constant 0 : index
    %c0_7 = arith.constant 0 : index
    %10 = vector.load %arg4[%c0_6, %c0_7] : memref<256x256xbf16, #tpu.memory_space<vmem>>, vector<256x256xbf16>
    %cst_8 = arith.constant dense<0.000000e+00> : vector<8x256xf32>
    %11 = tpu.matmul %9, %10, %cst_8 {dimension_numbers = #tpu.dot_dimension_numbers<[1], [0], [0], [1], [0, 0, 1, 1], [], []>} : vector<8x256xbf16>, vector<256x256xbf16>, vector<8x256xf32> -> vector<8x256xf32>
    %c0_9 = arith.constant 0 : index
    %c0_10 = arith.constant 0 : index
    %12 = vector.load %arg5[%c0_9, %c0_10] : memref<1x256xf32, #tpu.memory_space<vmem>>, vector<1x256xf32>
    %13 = vector.broadcast %12 : vector<1x256xf32> to vector<8x256xf32>
    %14 = arith.addf %11, %13 : vector<8x256xf32>
    %cst_11 = arith.constant 0.000000e+00 : f32
    %15 = vector.broadcast %cst_11 : f32 to vector<8x256xf32>
    %16 = arith.maximumf %14, %15 : vector<8x256xf32>
    %17 = arith.truncf %16 : vector<8x256xf32> to vector<8x256xbf16>
    %c0_12 = arith.constant 0 : index
    %c0_13 = arith.constant 0 : index
    %18 = vector.load %arg6[%c0_12, %c0_13] : memref<256x1024xbf16, #tpu.memory_space<vmem>>, vector<256x1024xbf16>
    %cst_14 = arith.constant dense<0.000000e+00> : vector<8x1024xf32>
    %19 = tpu.matmul %17, %18, %cst_14 {dimension_numbers = #tpu.dot_dimension_numbers<[1], [0], [0], [1], [0, 0, 1, 1], [], []>} : vector<8x256xbf16>, vector<256x1024xbf16>, vector<8x1024xf32> -> vector<8x1024xf32>
    %c0_15 = arith.constant 0 : index
    %c0_16 = arith.constant 0 : index
    %20 = vector.load %arg7[%c0_15, %c0_16] : memref<1x1024xf32, #tpu.memory_space<vmem>>, vector<1x1024xf32>
    %21 = vector.broadcast %20 : vector<1x1024xf32> to vector<8x1024xf32>
    %22 = arith.addf %19, %21 : vector<8x1024xf32>
    %23 = tpu.iota {dimensions = array<i32: 1>} : vector<8x1024xi32>
    %cst_17 = arith.constant dense<0xFF800000> : vector<8xf32>
    %24 = vector.multi_reduction <maximumf>, %22, %cst_17 [1] : vector<8x1024xf32> to vector<8xf32>
    %25 = vector.shape_cast %24 : vector<8xf32> to vector<8x1xf32>
    %26 = vector.broadcast %25 : vector<8x1xf32> to vector<8x1024xf32>
    %27 = arith.subf %22, %26 : vector<8x1024xf32>
    %28 = math.exp %27 : vector<8x1024xf32>
    %cst_18 = arith.constant dense<0.000000e+00> : vector<8xf32>
    %29 = vector.multi_reduction <add>, %28, %cst_18 [1] : vector<8x1024xf32> to vector<8xf32>
    %30 = vector.shape_cast %29 : vector<8xf32> to vector<8x1xf32>
    %31 = math.log %30 : vector<8x1xf32>
    %32 = arith.addf %25, %31 : vector<8x1xf32>
    %c0_19 = arith.constant 0 : index
    %c0_20 = arith.constant 0 : index
    %33 = vector.load %arg8[%c0_19, %c0_20] : memref<8x1xi32, #tpu.memory_space<vmem>>, vector<8x1xi32>
    %34 = vector.broadcast %33 : vector<8x1xi32> to vector<8x1024xi32>
    %35 = arith.cmpi eq, %23, %34 : vector<8x1024xi32>
    %cst_21 = arith.constant 0.000000e+00 : f32
    %36 = vector.broadcast %cst_21 : f32 to vector<8x1024xf32>
    %37 = arith.select %35, %22, %36 : vector<8x1024xi1>, vector<8x1024xf32>
    %cst_22 = arith.constant dense<0.000000e+00> : vector<8xf32>
    %38 = vector.multi_reduction <add>, %37, %cst_22 [1] : vector<8x1024xf32> to vector<8xf32>
    %39 = vector.shape_cast %38 : vector<8xf32> to vector<8x1xf32>
    %40 = arith.subf %32, %39 : vector<8x1xf32>
    %c0_23 = arith.constant 0 : index
    %c0_24 = arith.constant 0 : index
    %41 = vector.load %arg9[%c0_23, %c0_24] : memref<8x1xf32, #tpu.memory_space<vmem>>, vector<8x1xf32>
    tpu.vector_store %arg9[%c0_23, %c0_24], %40 {strides = array<i32>} : memref<8x1xf32, #tpu.memory_space<vmem>>, vector<8x1xf32>,
    %cst_25 = arith.constant dense<0xFF800000> : vector<8xf32>
    %42 = vector.multi_reduction <maximumf>, %22, %cst_25 [1] : vector<8x1024xf32> to vector<8xf32>
    %43 = vector.shape_cast %42 : vector<8xf32> to vector<8x1xf32>
    %44 = vector.broadcast %43 : vector<8x1xf32> to vector<8x1024xf32>
    %45 = arith.cmpf oeq, %22, %44 : vector<8x1024xf32>
    %c1024_i32 = arith.constant 1024 : i32
    %46 = vector.broadcast %c1024_i32 : i32 to vector<8x1024xi32>
    %47 = arith.select %45, %23, %46 : vector<8x1024xi1>, vector<8x1024xi32>
    %cst_26 = arith.constant dense<2147483647> : vector<8xi32>
    %48 = vector.multi_reduction <minsi>, %47, %cst_26 [1] : vector<8x1024xi32> to vector<8xi32>
    %49 = vector.shape_cast %48 : vector<8xi32> to vector<8x1xi32>
    %50 = vector.broadcast %49 : vector<8x1xi32> to vector<8x1024xi32>
    %51 = arith.cmpi eq, %23, %50 : vector<8x1024xi32>
    %cst_27 = arith.constant -3.000000e+38 : f32
    %52 = vector.broadcast %cst_27 : f32 to vector<8x1024xf32>
    %53 = arith.select %51, %52, %22 : vector<8x1024xi1>, vector<8x1024xf32>
    %cst_28 = arith.constant dense<0xFF800000> : vector<8xf32>
    %54 = vector.multi_reduction <maximumf>, %53, %cst_28 [1] : vector<8x1024xf32> to vector<8xf32>
    %55 = vector.shape_cast %54 : vector<8xf32> to vector<8x1xf32>
    %56 = vector.broadcast %55 : vector<8x1xf32> to vector<8x1024xf32>
    %57 = arith.cmpf oeq, %53, %56 : vector<8x1024xf32>
    %c1024_i32_29 = arith.constant 1024 : i32
    %58 = vector.broadcast %c1024_i32_29 : i32 to vector<8x1024xi32>
    %59 = arith.select %57, %23, %58 : vector<8x1024xi1>, vector<8x1024xi32>
    %cst_30 = arith.constant dense<2147483647> : vector<8xi32>
    %60 = vector.multi_reduction <minsi>, %59, %cst_30 [1] : vector<8x1024xi32> to vector<8xi32>
    %61 = vector.shape_cast %60 : vector<8xi32> to vector<8x1xi32>
    %62 = vector.broadcast %61 : vector<8x1xi32> to vector<8x1024xi32>
    %63 = arith.cmpi eq, %23, %62 : vector<8x1024xi32>
    %cst_31 = arith.constant -3.000000e+38 : f32
    %64 = vector.broadcast %cst_31 : f32 to vector<8x1024xf32>
    %65 = arith.select %63, %64, %53 : vector<8x1024xi1>, vector<8x1024xf32>
    %cst_32 = arith.constant dense<0xFF800000> : vector<8xf32>
    %66 = vector.multi_reduction <maximumf>, %65, %cst_32 [1] : vector<8x1024xf32> to vector<8xf32>
    %67 = vector.shape_cast %66 : vector<8xf32> to vector<8x1xf32>
    %68 = vector.broadcast %67 : vector<8x1xf32> to vector<8x1024xf32>
    %69 = arith.cmpf oeq, %65, %68 : vector<8x1024xf32>
    %c1024_i32_33 = arith.constant 1024 : i32
    %70 = vector.broadcast %c1024_i32_33 : i32 to vector<8x1024xi32>
    %71 = arith.select %69, %23, %70 : vector<8x1024xi1>, vector<8x1024xi32>
    %cst_34 = arith.constant dense<2147483647> : vector<8xi32>
    %72 = vector.multi_reduction <minsi>, %71, %cst_34 [1] : vector<8x1024xi32> to vector<8xi32>
    %73 = vector.shape_cast %72 : vector<8xi32> to vector<8x1xi32>
    %74 = vector.broadcast %73 : vector<8x1xi32> to vector<8x1024xi32>
    %75 = arith.cmpi eq, %23, %74 : vector<8x1024xi32>
    %cst_35 = arith.constant -3.000000e+38 : f32
    %76 = vector.broadcast %cst_35 : f32 to vector<8x1024xf32>
    %77 = arith.select %75, %76, %65 : vector<8x1024xi1>, vector<8x1024xf32>
    %cst_36 = arith.constant dense<0xFF800000> : vector<8xf32>
    %78 = vector.multi_reduction <maximumf>, %77, %cst_36 [1] : vector<8x1024xf32> to vector<8xf32>
    %79 = vector.shape_cast %78 : vector<8xf32> to vector<8x1xf32>
    %80 = vector.broadcast %79 : vector<8x1xf32> to vector<8x1024xf32>
    %81 = arith.cmpf oeq, %77, %80 : vector<8x1024xf32>
    %c1024_i32_37 = arith.constant 1024 : i32
    %82 = vector.broadcast %c1024_i32_37 : i32 to vector<8x1024xi32>
    %83 = arith.select %81, %23, %82 : vector<8x1024xi1>, vector<8x1024xi32>
    %cst_38 = arith.constant dense<2147483647> : vector<8xi32>
    %84 = vector.multi_reduction <minsi>, %83, %cst_38 [1] : vector<8x1024xi32> to vector<8xi32>
    %85 = vector.shape_cast %84 : vector<8xi32> to vector<8x1xi32>
    %86 = vector.broadcast %85 : vector<8x1xi32> to vector<8x1024xi32>
    %87 = arith.cmpi eq, %23, %86 : vector<8x1024xi32>
    %cst_39 = arith.constant -3.000000e+38 : f32
    %88 = vector.broadcast %cst_39 : f32 to vector<8x1024xf32>
    %89 = arith.select %87, %88, %77 : vector<8x1024xi1>, vector<8x1024xf32>
    %cst_40 = arith.constant dense<0xFF800000> : vector<8xf32>
    %90 = vector.multi_reduction <maximumf>, %89, %cst_40 [1] : vector<8x1024xf32> to vector<8xf32>
    %91 = vector.shape_cast %90 : vector<8xf32> to vector<8x1xf32>
    %92 = vector.broadcast %91 : vector<8x1xf32> to vector<8x1024xf32>
    %93 = arith.cmpf oeq, %89, %92 : vector<8x1024xf32>
    %c1024_i32_41 = arith.constant 1024 : i32
    %94 = vector.broadcast %c1024_i32_41 : i32 to vector<8x1024xi32>
    %95 = arith.select %93, %23, %94 : vector<8x1024xi1>, vector<8x1024xi32>
    %cst_42 = arith.constant dense<2147483647> : vector<8xi32>
    %96 = vector.multi_reduction <minsi>, %95, %cst_42 [1] : vector<8x1024xi32> to vector<8xi32>
    %97 = vector.shape_cast %96 : vector<8xi32> to vector<8x1xi32>
    %98 = tpu.iota {dimensions = array<i32: 1>} : vector<8x5xi32>
    %c0_i32 = arith.constant 0 : i32
    %99 = vector.broadcast %c0_i32 : i32 to vector<8x5xi32>
    %c0_i32_43 = arith.constant 0 : i32
    %100 = vector.broadcast %c0_i32_43 : i32 to vector<8x5xi32>
    %101 = arith.cmpi eq, %98, %100 : vector<8x5xi32>
    %102 = vector.shape_cast %49 : vector<8x1xi32> to vector<8x1xi32>
    %103 = vector.broadcast %102 : vector<8x1xi32> to vector<8x5xi32>
    %104 = arith.select %101, %103, %99 : vector<8x5xi1>, vector<8x5xi32>
    %c1_i32 = arith.constant 1 : i32
    %105 = vector.broadcast %c1_i32 : i32 to vector<8x5xi32>
    %106 = arith.cmpi eq, %98, %105 : vector<8x5xi32>
    %107 = vector.shape_cast %61 : vector<8x1xi32> to vector<8x1xi32>
    %108 = vector.broadcast %107 : vector<8x1xi32> to vector<8x5xi32>
    %109 = arith.select %106, %108, %104 : vector<8x5xi1>, vector<8x5xi32>
    %c2_i32 = arith.constant 2 : i32
    %110 = vector.broadcast %c2_i32 : i32 to vector<8x5xi32>
    %111 = arith.cmpi eq, %98, %110 : vector<8x5xi32>
    %112 = vector.shape_cast %73 : vector<8x1xi32> to vector<8x1xi32>
    %113 = vector.broadcast %112 : vector<8x1xi32> to vector<8x5xi32>
    %114 = arith.select %111, %113, %109 : vector<8x5xi1>, vector<8x5xi32>
    %c3_i32 = arith.constant 3 : i32
    %115 = vector.broadcast %c3_i32 : i32 to vector<8x5xi32>
    %116 = arith.cmpi eq, %98, %115 : vector<8x5xi32>
    %117 = vector.shape_cast %85 : vector<8x1xi32> to vector<8x1xi32>
    %118 = vector.broadcast %117 : vector<8x1xi32> to vector<8x5xi32>
    %119 = arith.select %116, %118, %114 : vector<8x5xi1>, vector<8x5xi32>
    %c4_i32 = arith.constant 4 : i32
    %120 = vector.broadcast %c4_i32 : i32 to vector<8x5xi32>
    %121 = arith.cmpi eq, %98, %120 : vector<8x5xi32>
    %122 = vector.shape_cast %97 : vector<8x1xi32> to vector<8x1xi32>
    %123 = vector.broadcast %122 : vector<8x1xi32> to vector<8x5xi32>
    %124 = arith.select %121, %123, %119 : vector<8x5xi1>, vector<8x5xi32>
    %c0_44 = arith.constant 0 : index
    %c0_45 = arith.constant 0 : index
    %125 = vector.load %arg10[%c0_44, %c0_45] : memref<8x5xi32, #tpu.memory_space<vmem>>, vector<8x5xi32>
    tpu.vector_store %arg10[%c0_44, %c0_45], %124 {strides = array<i32>} : memref<8x5xi32, #tpu.memory_space<vmem>>, vector<8x5xi32>,
    return
  }
  func.func @transform_0(%arg0: i32) -> (i32, i32) {
    %c0_i32 = arith.constant 0 : i32
    %c0_i32_0 = arith.constant 0 : i32
    return %arg0, %c0_i32 : i32, i32
  }
  func.func @transform_1(%arg0: i32) -> (i32, i32) {
    %c0_i32 = arith.constant 0 : i32
    %c0_i32_0 = arith.constant 0 : i32
    %c0_i32_1 = arith.constant 0 : i32
    return %c0_i32, %c0_i32_0 : i32, i32
  }
  func.func @transform_2(%arg0: i32) -> (i32, i32) {
    %c0_i32 = arith.constant 0 : i32
    %c0_i32_0 = arith.constant 0 : i32
    %c0_i32_1 = arith.constant 0 : i32
    return %c0_i32, %c0_i32_0 : i32, i32
  }
  func.func @transform_3(%arg0: i32) -> (i32, i32) {
    %c0_i32 = arith.constant 0 : i32
    %c0_i32_0 = arith.constant 0 : i32
    %c0_i32_1 = arith.constant 0 : i32
    return %c0_i32, %c0_i32_0 : i32, i32
  }
  func.func @transform_4(%arg0: i32) -> (i32, i32) {
    %c0_i32 = arith.constant 0 : i32
    %c0_i32_0 = arith.constant 0 : i32
    %c0_i32_1 = arith.constant 0 : i32
    return %c0_i32, %c0_i32_0 : i32, i32
  }
  func.func @transform_5(%arg0: i32) -> (i32, i32) {
    %c0_i32 = arith.constant 0 : i32
    %c0_i32_0 = arith.constant 0 : i32
    %c0_i32_1 = arith.constant 0 : i32
    return %c0_i32, %c0_i32_0 : i32, i32
  }
  func.func @transform_6(%arg0: i32) -> (i32, i32) {
    %c0_i32 = arith.constant 0 : i32
    %c0_i32_0 = arith.constant 0 : i32
    %c0_i32_1 = arith.constant 0 : i32
    return %c0_i32, %c0_i32_0 : i32, i32
  }
  func.func @transform_7(%arg0: i32) -> (i32, i32) {
    %c0_i32 = arith.constant 0 : i32
    %c0_i32_0 = arith.constant 0 : i32
    return %arg0, %c0_i32 : i32, i32
  }
  func.func @transform_8(%arg0: i32) -> (i32, i32) {
    %c0_i32 = arith.constant 0 : i32
    %c0_i32_0 = arith.constant 0 : i32
    return %arg0, %c0_i32 : i32, i32
  }
  func.func @transform_9(%arg0: i32) -> (i32, i32) {
    %c0_i32 = arith.constant 0 : i32
    %c0_i32_0 = arith.constant 0 : i32
    return %arg0, %c0_i32 : i32, i32
  }
}

</mosaic_0001>

<llo_original>
// kernel: spotter_forward.1
$region0: #{spotter_forward.1}
  #allocation0 [shape = 'u32[]', space=smem, size = 0x4, offset = 0x4, fixed_abs, tag = 'smem constant byte address 0x4 - core index']
  #allocation1 [shape = 'u32[144,128]{1,0:T(1,128)}', space=vmem, size = 0x12000, scoped, tag = 'internal scratch']
  %s0 = inlined_call_operand.hbm [shape: f32[8,1024], index: 0, kind: input, shape index: {}]
  %s1 = inlined_call_operand.hbm [shape: bf16[1024,256], index: 1, kind: input, shape index: {}]
  %s2 = inlined_call_operand.vmem [shape: f32[1,256], index: 2, kind: input, shape index: {}]
  %s3 = inlined_call_operand.hbm [shape: bf16[256,256], index: 3, kind: input, shape index: {}]
  %s4 = inlined_call_operand.vmem [shape: f32[1,256], index: 4, kind: input, shape index: {}]
  %s5 = inlined_call_operand.hbm [shape: bf16[256,1024], index: 5, kind: input, shape index: {}]
  %s6 = inlined_call_operand.vmem [shape: f32[1,1024], index: 6, kind: input, shape index: {}]
  %s7 = inlined_call_operand.vmem [shape: s32[8,1], index: 7, kind: input, shape index: {}]
  %s8 = inlined_call_operand.vmem [shape: f32[8,1], index: 8, kind: output, shape index: {0}]
  %s9 = inlined_call_operand.hbm [shape: s32[8,5], index: 9, kind: output, shape index: {1}]
  %10 = xla_tuple %s8, %s9
  %s11 = sld [smem:[#allocation0]]
  $region66: #{spotter_forward.1} parent=0
    _
  %s13 = ssub.s32 1, %s11
  %s14 = scalar_select 0, %s13, %s11
  $region1: #{spotter_forward.1} parent=0
    #allocation2 [shape = 'u8[32768]{0}', space=vmem, size = 0x8000, scoped, tag = 'input window, operand 0, single buffered']
    #allocation3 [shape = 's32[1]{0}', space=sflag, size = 0x4, scoped, tag = 'scoped memory for spotter_forward.1']
    #allocation4 [shape = 's32[1]{0}', space=sflag, size = 0x4, scoped, tag = 'scoped memory for spotter_forward.1']
    #allocation5 [shape = 'u8[524288]{0}', space=vmem, size = 0x80000, scoped, tag = 'input window, operand 1, single buffered']
    #allocation6 [shape = 's32[1]{0}', space=sflag, size = 0x4, scoped, tag = 'scoped memory for spotter_forward.1']
    #allocation7 [shape = 'u8[131072]{0}', space=vmem, size = 0x20000, scoped, tag = 'input window, operand 3, single buffered']
    #allocation8 [shape = 'u8[524288]{0}', space=vmem, size = 0x80000, scoped, tag = 'input window, operand 5, single buffered']
    #allocation9 [shape = 's32[1]{0}', space=sflag, size = 0x4, scoped, tag = 'scoped memory for spotter_forward.1']
    #allocation10 [shape = 'u8[4096]{0}', space=vmem, size = 0x1000, scoped, tag = 'output window, operand 1, single buffered']
    %15 = vsyncpa [#allocation3], 0
    %16 = vsyncpa [#allocation6], 0
    %17 = vsyncpa [#allocation9], 0
    %18 = vsyncpa [#allocation4], 0
    // Predicated region
    $region2: #{spotter_forward.1} parent=1 // pred_check
      _
    $region3: #{spotter_forward.1} parent=1 // pred_check_branch
      %20 = sbr.rel (0) target = $region5
    $region4: #{spotter_forward.1} parent=1 // pred_region
      %s22 = ssub.s32 1024, 1024
      %23 = vsyncadd [#allocation3], %s22
      %s25 = sshll.u32 [#allocation2], 4
      %s26 = int_to_ptr.vmem [resolvable:$true] %s25
      %28 = dma.hbm_to_vmem [thread:$0]  %s0, 1024, %s26, [#allocation3]
    $region5: #{spotter_forward.1} parent=1 // pred_fallthru
      _
    // Predicated region
    $region6: #{spotter_forward.1} parent=1 // pred_check
      _
    $region7: #{spotter_forward.1} parent=1 // pred_check_branch
      %30 = sbr.rel (0) target = $region9
    $region8: #{spotter_forward.1} parent=1 // pred_region
      %s32 = ssub.s32 16384, 16384
      %33 = vsyncadd [#allocation6], %s32
      %s34 = sshll.u32 [#allocation5], 4
      %s35 = int_to_ptr.vmem [resolvable:$true] %s34
      %40 = dma.hbm_to_vmem [thread:$0]  %s1, 16384, %s35, [#allocation6], 128, 128, 8
    $region9: #{spotter_forward.1} parent=1 // pred_fallthru
      _
    // Predicated region
    $region10: #{spotter_forward.1} parent=1 // pred_check
      _
    $region11: #{spotter_forward.1} parent=1 // pred_check_branch
      %42 = sbr.rel (0) target = $region13
    $region12: #{spotter_forward.1} parent=1 // pred_region
      _
    $region13: #{spotter_forward.1} parent=1 // pred_fallthru
      _
    // Predicated region
    $region14: #{spotter_forward.1} parent=1 // pred_check
      _
    $region15: #{spotter_forward.1} parent=1 // pred_check_branch
      %44 = sbr.rel (0) target = $region17
    $region16: #{spotter_forward.1} parent=1 // pred_region
      %s46 = ssub.s32 4096, 4096
      %47 = vsyncadd [#allocation6], %s46
      %s48 = sshll.u32 [#allocation7], 4
      %s49 = int_to_ptr.vmem [resolvable:$true] %s48
      %54 = dma.hbm_to_vmem [thread:$0]  %s3, 4096, %s49, [#allocation6], 128, 128, 8
    $region17: #{spotter_forward.1} parent=1 // pred_fallthru
      _
    // Predicated region
    $region18: #{spotter_forward.1} parent=1 // pred_check
      _
    $region19: #{spotter_forward.1} parent=1 // pred_check_branch
      %56 = sbr.rel (0) target = $region21
    $region20: #{spotter_forward.1} parent=1 // pred_region
      _
    $region21: #{spotter_forward.1} parent=1 // pred_fallthru
      _
    // Predicated region
    $region22: #{spotter_forward.1} parent=1 // pred_check
      _
    $region23: #{spotter_forward.1} parent=1 // pred_check_branch
      %58 = sbr.rel (0) target = $region25
    $region24: #{spotter_forward.1} parent=1 // pred_region
      %s60 = ssub.s32 16384, 16384
      %61 = vsyncadd [#allocation9], %s60
      %s62 = sshll.u32 [#allocation8], 4
      %s63 = int_to_ptr.vmem [resolvable:$true] %s62
      %68 = dma.hbm_to_vmem [thread:$0]  %s5, 16384, %s63, [#allocation9], 512, 512, 32
    $region25: #{spotter_forward.1} parent=1 // pred_fallthru
      _
    // Predicated region
    $region26: #{spotter_forward.1} parent=1 // pred_check
      _
    $region27: #{spotter_forward.1} parent=1 // pred_check_branch
      %70 = sbr.rel (0) target = $region29
    $region28: #{spotter_forward.1} parent=1 // pred_region
      _
    $region29: #{spotter_forward.1} parent=1 // pred_fallthru
      _
    // Predicated region
    $region30: #{spotter_forward.1} parent=1 // pred_check
      _
    $region31: #{spotter_forward.1} parent=1 // pred_check_branch
      %72 = sbr.rel (0) target = $region33
    $region32: #{spotter_forward.1} parent=1 // pred_region
      _
    $region33: #{spotter_forward.1} parent=1 // pred_fallthru
      _
    // Predicated region
    $region34: #{spotter_forward.1} parent=1 // pred_check
      _
    $region35: #{spotter_forward.1} parent=1 // pred_check_branch
      %74 = sbr.rel (0) target = $region37
    $region36: #{spotter_forward.1} parent=1 // pred_region
      %75 = dma.done [#allocation3], 1024
    $region37: #{spotter_forward.1} parent=1 // pred_fallthru
      _
    // Predicated region
    $region38: #{spotter_forward.1} parent=1 // pred_check
      _
    $region39: #{spotter_forward.1} parent=1 // pred_check_branch
      %77 = sbr.rel (0) target = $region41
    $region40: #{spotter_forward.1} parent=1 // pred_region
      %78 = dma.done [#allocation6], 16384
    $region41: #{spotter_forward.1} parent=1 // pred_fallthru
      _
    // Predicated region
    $region42: #{spotter_forward.1} parent=1 // pred_check
      _
    $region43: #{spotter_forward.1} parent=1 // pred_check_branch
      %80 = sbr.rel (0) target = $region45
    $region44: #{spotter_forward.1} parent=1 // pred_region
      %81 = dma.done [#allocation6], 4096
    $region45: #{spotter_forward.1} parent=1 // pred_fallthru
      _
    // Predicated region
    $region46: #{spotter_forward.1} parent=1 // pred_check
      _
    $region47: #{spotter_forward.1} parent=1 // pred_check_branch
      %83 = sbr.rel (0) target = $region49
    $region48: #{spotter_forward.1} parent=1 // pred_region
      %84 = dma.done [#allocation9], 16384
    $region49: #{spotter_forward.1} parent=1 // pred_fallthru
      _
    %v85 = vld [vmem:[#allocation2] sm:$0xff]
    %v86 = vld [vmem:[#allocation2 + $0x8] sm:$0xff]
    %v87 = vld [vmem:[#allocation2 + $0x10] sm:$0xff]
    %v88 = vld [vmem:[#allocation2 + $0x18] sm:$0xff]
    %v89 = vld [vmem:[#allocation2 + $0x20] sm:$0xff]
    %v90 = vld [vmem:[#allocation2 + $0x28] sm:$0xff]
    %v91 = vld [vmem:[#allocation2 + $0x30] sm:$0xff]
    %v92 = vld [vmem:[#allocation2 + $0x38] sm:$0xff]
    %v93 = vpack.c.bf16 %v85, %v85
    %v94 = vpack.c.bf16 %v86, %v86
    %v95 = vpack.c.bf16 %v87, %v87
    %v96 = vpack.c.bf16 %v88, %v88
    %v97 = vpack.c.bf16 %v89, %v89
    %v98 = vpack.c.bf16 %v90, %v90
    %v99 = vpack.c.bf16 %v91, %v91
    %v100 = vpack.c.bf16 %v92, %v92
    %v101 = vld [vmem:[#allocation5] sm:$0xff]
    %v102 = vld [vmem:[#allocation5 + $0x8] sm:$0xff]
    %v103 = vld [vmem:[#allocation5 + $0x10] sm:$0xff]
    %v104 = vld [vmem:[#allocation5 + $0x18] sm:$0xff]
    %v105 = vld [vmem:[#allocation5 + $0x20] sm:$0xff]
    %v106 = vld [vmem:[#allocation5 + $0x28] sm:$0xff]
    %v107 = vld [vmem:[#allocation5 + $0x30] sm:$0xff]
    %v108 = vld [vmem:[#allocation5 + $0x38] sm:$0xff]
    %v109 = vld [vmem:[#allocation5 + $0x40] sm:$0xff]
    %v110 = vld [vmem:[#allocation5 + $0x48] sm:$0xff]
    %v111 = vld [vmem:[#allocation5 + $0x50] sm:$0xff]
    %v112 = vld [vmem:[#allocation5 + $0x58] sm:$0xff]
    %v113 = vld [vmem:[#allocation5 + $0x60] sm:$0xff]
    %v114 = vld [vmem:[#allocation5 + $0x68] sm:$0xff]
    %v115 = vld [vmem:[#allocation5 + $0x70] sm:$0xff]
    %v116 = vld [vmem:[#allocation5 + $0x78] sm:$0xff]
    %v117 = vld [vmem:[#allocation5 + $0x80] sm:$0xff]
    %v118 = vld [vmem:[#allocation5 + $0x88] sm:$0xff]
    %v119 = vld [vmem:[#allocation5 + $0x90] sm:$0xff]
    %v120 = vld [vmem:[#allocation5 + $0x98] sm:$0xff]
    %v121 = vld [vmem:[#allocation5 + $0xa0] sm:$0xff]
    %v122 = vld [vmem:[#allocation5 + $0xa8] sm:$0xff]
    %v123 = vld [vmem:[#allocation5 + $0xb0] sm:$0xff]
    %v124 = vld [vmem:[#allocation5 + $0xb8] sm:$0xff]
    %v125 = vld [vmem:[#allocation5 + $0xc0] sm:$0xff]
    %v126 = vld [vmem:[#allocation5 + $0xc8] sm:$0xff]
    %v127 = vld [vmem:[#allocation5 + $0xd0] sm:$0xff]
    %v128 = vld [vmem:[#allocation5 + $0xd8] sm:$0xff]
    %v129 = vld [vmem:[#allocation5 + $0xe0] sm:$0xff]
    %v130 = vld [vmem:[#allocation5 + $0xe8] sm:$0xff]
    %v131 = vld [vmem:[#allocation5 + $0xf0] sm:$0xff]
    %v132 = vld [vmem:[#allocation5 + $0xf8] sm:$0xff]
    %v133 = vld [vmem:[#allocation5 + $0x100] sm:$0xff]
    %v134 = vld [vmem:[#allocation5 + $0x108] sm:$0xff]
    %v135 = vld [vmem:[#allocation5 + $0x110] sm:$0xff]
    %v136 = vld [vmem:[#allocation5 + $0x118] sm:$0xff]
    %v137 = vld [vmem:[#allocation5 + $0x120] sm:$0xff]
    %v138 = vld [vmem:[#allocation5 + $0x128] sm:$0xff]
    %v139 = vld [vmem:[#allocation5 + $0x130] sm:$0xff]
    %v140 = vld [vmem:[#allocation5 + $0x138] sm:$0xff]
    %v141 = vld [vmem:[#allocation5 + $0x140] sm:$0xff]
    %v142 = vld [vmem:[#allocation5 + $0x148] sm:$0xff]
    %v143 = vld [vmem:[#allocation5 + $0x150] sm:$0xff]
    %v144 = vld [vmem:[#allocation5 + $0x158] sm:$0xff]
    %v145 = vld [vmem:[#allocation5 + $0x160] sm:$0xff]
    %v146 = vld [vmem:[#allocation5 + $0x168] sm:$0xff]
    %v147 = vld [vmem:[#allocation5 + $0x170] sm:$0xff]
    %v148 = vld [vmem:[#allocation5 + $0x178] sm:$0xff]
    %v149 = vld [vmem:[#allocation5 + $0x180] sm:$0xff]
    %v150 = vld [vmem:[#allocation5 + $0x188] sm:$0xff]
    %v151 = vld [vmem:[#allocation5 + $0x190] sm:$0xff]
    %v152 = vld [vmem:[#allocation5 + $0x198] sm:$0xff]
    %v153 = vld [vmem:[#allocation5 + $0x1a0] sm:$0xff]
    %v154 = vld [vmem:[#allocation5 + $0x1a8] sm:$0xff]
    %v155 = vld [vmem:[#allocation5 + $0x1b0] sm:$0xff]
    %v156 = vld [vmem:[#allocation5 + $0x1b8] sm:$0xff]
    %v157 = vld [vmem:[#allocation5 + $0x1c0] sm:$0xff]
    %v158 = vld [vmem:[#allocation5 + $0x1c8] sm:$0xff]
    %v159 = vld [vmem:[#allocation5 + $0x1d0] sm:$0xff]
    %v160 = vld [vmem:[#allocation5 + $0x1d8] sm:$0xff]
    %v161 = vld [vmem:[#allocation5 + $0x1e0] sm:$0xff]
    %v162 = vld [vmem:[#allocation5 + $0x1e8] sm:$0xff]
    %v163 = vld [vmem:[#allocation5 + $0x1f0] sm:$0xff]
    %v164 = vld [vmem:[#allocation5 + $0x1f8] sm:$0xff]
    %v165 = vld [vmem:[#allocation5 + $0x200] sm:$0xff]
    %v166 = vld [vmem:[#allocation5 + $0x208] sm:$0xff]
    %v167 = vld [vmem:[#allocation5 + $0x210] sm:$0xff]
    %v168 = vld [vmem:[#allocation5 + $0x218] sm:$0xff]
    %v169 = vld [vmem:[#allocation5 + $0x220] sm:$0xff]
    %v170 = vld [vmem:[#allocation5 + $0x228] sm:$0xff]
    %v171 = vld [vmem:[#allocation5 + $0x230] sm:$0xff]
    %v172 = vld [vmem:[#allocation5 + $0x238] sm:$0xff]
    %v173 = vld [vmem:[#allocation5 + $0x240] sm:$0xff]
    %v174 = vld [vmem:[#allocation5 + $0x248] sm:$0xff]
    %v175 = vld [vmem:[#allocation5 + $0x250] sm:$0xff]
    %v176 = vld [vmem:[#allocation5 + $0x258] sm:$0xff]
    %v177 = vld [vmem:[#allocation5 + $0x260] sm:$0xff]
    %v178 = vld [vmem:[#allocation5 + $0x268] sm:$0xff]
    %v179 = vld [vmem:[#allocation5 + $0x270] sm:$0xff]
    %v180 = vld [vmem:[#allocation5 + $0x278] sm:$0xff]
    %v181 = vld [vmem:[#allocation5 + $0x280] sm:$0xff]
    %v182 = vld [vmem:[#allocation5 + $0x288] sm:$0xff]
    %v183 = vld [vmem:[#allocation5 + $0x290] sm:$0xff]
    %v184 = vld [vmem:[#allocation5 + $0x298] sm:$0xff]
    %v185 = vld [vmem:[#allocation5 + $0x2a0] sm:$0xff]
    %v186 = vld [vmem:[#allocation5 + $0x2a8] sm:$0xff]
    %v187 = vld [vmem:[#allocation5 + $0x2b0] sm:$0xff]
    %v188 = vld [vmem:[#allocation5 + $0x2b8] sm:$0xff]
    %v189 = vld [vmem:[#allocation5 + $0x2c0] sm:$0xff]
    %v190 = vld [vmem:[#allocation5 + $0x2c8] sm:$0xff]
    %v191 = vld [vmem:[#allocation5 + $0x2d0] sm:$0xff]
    %v192 = vld [vmem:[#allocation5 + $0x2d8] sm:$0xff]
    %v193 = vld [vmem:[#allocation5 + $0x2e0] sm:$0xff]
    %v194 = vld [vmem:[#allocation5 + $0x2e8] sm:$0xff]
    %v195 = vld [vmem:[#allocation5 + $0x2f0] sm:$0xff]
    %v196 = vld [vmem:[#allocation5 + $0x2f8] sm:$0xff]
    %v197 = vld [vmem:[#allocation5 + $0x300] sm:$0xff]
    %v198 = vld [vmem:[#allocation5 + $0x308] sm:$0xff]
    %v199 = vld [vmem:[#allocation5 + $0x310] sm:$0xff]
    %v200 = vld [vmem:[#allocation5 + $0x318] sm:$0xff]
    %v201 = vld [vmem:[#allocation5 + $0x320] sm:$0xff]
    %v202 = vld [vmem:[#allocation5 + $0x328] sm:$0xff]
    %v203 = vld [vmem:[#allocation5 + $0x330] sm:$0xff]
    %v204 = vld [vmem:[#allocation5 + $0x338] sm:$0xff]
    %v205 = vld [vmem:[#allocation5 + $0x340] sm:$0xff]
    %v206 = vld [vmem:[#allocation5 + $0x348] sm:$0xff]
    %v207 = vld [vmem:[#allocation5 + $0x350] sm:$0xff]
    %v208 = vld [vmem:[#allocation5 + $0x358] sm:$0xff]
    %v209 = vld [vmem:[#allocation5 + $0x360] sm:$0xff]
    %v210 = vld [vmem:[#allocation5 + $0x368] sm:$0xff]
    %v211 = vld [vmem:[#allocation5 + $0x370] sm:$0xff]
    %v212 = vld [vmem:[#allocation5 + $0x378] sm:$0xff]
    %v213 = vld [vmem:[#allocation5 + $0x380] sm:$0xff]
    %v214 = vld [vmem:[#allocation5 + $0x388] sm:$0xff]
    %v215 = vld [vmem:[#allocation5 + $0x390] sm:$0xff]
    %v216 = vld [vmem:[#allocation5 + $0x398] sm:$0xff]
    %v217 = vld [vmem:[#allocation5 + $0x3a0] sm:$0xff]
    %v218 = vld [vmem:[#allocation5 + $0x3a8] sm:$0xff]
    %v219 = vld [vmem:[#allocation5 + $0x3b0] sm:$0xff]
    %v220 = vld [vmem:[#allocation5 + $0x3b8] sm:$0xff]
    %v221 = vld [vmem:[#allocation5 + $0x3c0] sm:$0xff]
    %v222 = vld [vmem:[#allocation5 + $0x3c8] sm:$0xff]
    %v223 = vld [vmem:[#allocation5 + $0x3d0] sm:$0xff]
    %v224 = vld [vmem:[#allocation5 + $0x3d8] sm:$0xff]
    %v225 = vld [vmem:[#allocation5 + $0x3e0] sm:$0xff]
    %v226 = vld [vmem:[#allocation5 + $0x3e8] sm:$0xff]
    %v227 = vld [vmem:[#allocation5 + $0x3f0] sm:$0xff]
    %v228 = vld [vmem:[#allocation5 + $0x3f8] sm:$0xff]
    %v229 = vld [vmem:[%s2] sm:$0x3]
    %v231 = vlaneseq
    %v232 = vshrl.u32 %v231, 7
    %v233 = vsub.s32 0, %v232
    %v234 = vrot.slane %v229, %v233
    %v235 = vlaneseq
    %v236 = vshrl.u32 %v235, 7
    %v237 = vsub.s32 1, %v236
    %v238 = vrot.slane %v229, %v237
    %v369 = vunpack.c.l.b16 %v101
    %v370 = vunpack.c.h.b16 %v101
    %v371 = vunpack.c.l.b16 %v102
    %v372 = vunpack.c.h.b16 %v102
    %v373 = vunpack.c.l.b16 %v103
    %v374 = vunpack.c.h.b16 %v103
    %v375 = vunpack.c.l.b16 %v104
    %v376 = vunpack.c.h.b16 %v104
    %v377 = vunpack.c.l.b16 %v105
    %v378 = vunpack.c.h.b16 %v105
    %v379 = vunpack.c.l.b16 %v106
    %v380 = vunpack.c.h.b16 %v106
    %v381 = vunpack.c.l.b16 %v107
    %v382 = vunpack.c.h.b16 %v107
    %v383 = vunpack.c.l.b16 %v108
    %v384 = vunpack.c.h.b16 %v108
    %v385 = vunpack.c.l.b16 %v109
    %v386 = vunpack.c.h.b16 %v109
    %v387 = vunpack.c.l.b16 %v110
    %v388 = vunpack.c.h.b16 %v110
    %v389 = vunpack.c.l.b16 %v111
    %v390 = vunpack.c.h.b16 %v111
    %v391 = vunpack.c.l.b16 %v112
    %v392 = vunpack.c.h.b16 %v112
    %v393 = vunpack.c.l.b16 %v113
    %v394 = vunpack.c.h.b16 %v113
    %v395 = vunpack.c.l.b16 %v114
    %v396 = vunpack.c.h.b16 %v114
    %v397 = vunpack.c.l.b16 %v115
    %v398 = vunpack.c.h.b16 %v115
    %v399 = vunpack.c.l.b16 %v116
    %v400 = vunpack.c.h.b16 %v116
    %v401 = vunpack.c.l.b16 %v117
    %v402 = vunpack.c.h.b16 %v117
    %v403 = vunpack.c.l.b16 %v118
    %v404 = vunpack.c.h.b16 %v118
    %v405 = vunpack.c.l.b16 %v119
    %v406 = vunpack.c.h.b16 %v119
    %v407 = vunpack.c.l.b16 %v120
    %v408 = vunpack.c.h.b16 %v120
    %v409 = vunpack.c.l.b16 %v121
    %v410 = vunpack.c.h.b16 %v121
    %v411 = vunpack.c.l.b16 %v122
    %v412 = vunpack.c.h.b16 %v122
    %v413 = vunpack.c.l.b16 %v123
    %v414 = vunpack.c.h.b16 %v123
    %v415 = vunpack.c.l.b16 %v124
    %v416 = vunpack.c.h.b16 %v124
    %v417 = vunpack.c.l.b16 %v125
    %v418 = vunpack.c.h.b16 %v125
    %v419 = vunpack.c.l.b16 %v126
    %v420 = vunpack.c.h.b16 %v126
    %v421 = vunpack.c.l.b16 %v127
    %v422 = vunpack.c.h.b16 %v127
    %v423 = vunpack.c.l.b16 %v128
    %v424 = vunpack.c.h.b16 %v128
    %v425 = vunpack.c.l.b16 %v129
    %v426 = vunpack.c.h.b16 %v129
    %v427 = vunpack.c.l.b16 %v130
    %v428 = vunpack.c.h.b16 %v130
    %v429 = vunpack.c.l.b16 %v131
    %v430 = vunpack.c.h.b16 %v131
    %v431 = vunpack.c.l.b16 %v132
    %v432 = vunpack.c.h.b16 %v132
    %v433 = vunpack.c.l.b16 %v133
    %v434 = vunpack.c.h.b16 %v133
    %v435 = vunpack.c.l.b16 %v134
    %v436 = vunpack.c.h.b16 %v134
    %v437 = vunpack.c.l.b16 %v135
    %v438 = vunpack.c.h.b16 %v135
    %v439 = vunpack.c.l.b16 %v136
    %v440 = vunpack.c.h.b16 %v136
    %v441 = vunpack.c.l.b16 %v137
    %v442 = vunpack.c.h.b16 %v137
    %v443 = vunpack.c.l.b16 %v138
    %v444 = vunpack.c.h.b16 %v138
    %v445 = vunpack.c.l.b16 %v139
    %v446 = vunpack.c.h.b16 %v139
    %v447 = vunpack.c.l.b16 %v140
    %v448 = vunpack.c.h.b16 %v140
    %v449 = vunpack.c.l.b16 %v141
    %v450 = vunpack.c.h.b16 %v141
    %v451 = vunpack.c.l.b16 %v142
    %v452 = vunpack.c.h.b16 %v142
    %v453 = vunpack.c.l.b16 %v143
    %v454 = vunpack.c.h.b16 %v143
    %v455 = vunpack.c.l.b16 %v144
    %v456 = vunpack.c.h.b16 %v144
    %v457 = vunpack.c.l.b16 %v145
    %v458 = vunpack.c.h.b16 %v145
    %v459 = vunpack.c.l.b16 %v146
    %v460 = vunpack.c.h.b16 %v146
    %v461 = vunpack.c.l.b16 %v147
    %v462 = vunpack.c.h.b16 %v147
    %v463 = vunpack.c.l.b16 %v148
    %v464 = vunpack.c.h.b16 %v148
    %v465 = vunpack.c.l.b16 %v149
    %v466 = vunpack.c.h.b16 %v149
    %v467 = vunpack.c.l.b16 %v150
    %v468 = vunpack.c.h.b16 %v150
    %v469 = vunpack.c.l.b16 %v151
    %v470 = vunpack.c.h.b16 %v151
    %v471 = vunpack.c.l.b16 %v152
    %v472 = vunpack.c.h.b16 %v152
    %v473 = vunpack.c.l.b16 %v153
    %v474 = vunpack.c.h.b16 %v153
    %v475 = vunpack.c.l.b16 %v154
    %v476 = vunpack.c.h.b16 %v154
    %v477 = vunpack.c.l.b16 %v155
    %v478 = vunpack.c.h.b16 %v155
    %v479 = vunpack.c.l.b16 %v156
    %v480 = vunpack.c.h.b16 %v156
    %v481 = vunpack.c.l.b16 %v157
    %v482 = vunpack.c.h.b16 %v157
    %v483 = vunpack.c.l.b16 %v158
    %v484 = vunpack.c.h.b16 %v158
    %v485 = vunpack.c.l.b16 %v159
    %v486 = vunpack.c.h.b16 %v159
    %v487 = vunpack.c.l.b16 %v160
    %v488 = vunpack.c.h.b16 %v160
    %v489 = vunpack.c.l.b16 %v161
    %v490 = vunpack.c.h.b16 %v161
    %v491 = vunpack.c.l.b16 %v162
    %v492 = vunpack.c.h.b16 %v162
    %v493 = vunpack.c.l.b16 %v163
    %v494 = vunpack.c.h.b16 %v163
    %v495 = vunpack.c.l.b16 %v164
    %v496 = vunpack.c.h.b16 %v164
    %v497 = vunpack.c.l.b16 %v165
    %v498 = vunpack.c.h.b16 %v165
    %v499 = vunpack.c.l.b16 %v166
    %v500 = vunpack.c.h.b16 %v166
    %v501 = vunpack.c.l.b16 %v167
    %v502 = vunpack.c.h.b16 %v167
    %v503 = vunpack.c.l.b16 %v168
    %v504 = vunpack.c.h.b16 %v168
    %v505 = vunpack.c.l.b16 %v169
    %v506 = vunpack.c.h.b16 %v169
    %v507 = vunpack.c.l.b16 %v170
    %v508 = vunpack.c.h.b16 %v170
    %v509 = vunpack.c.l.b16 %v171
    %v510 = vunpack.c.h.b16 %v171
    %v511 = vunpack.c.l.b16 %v172
    %v512 = vunpack.c.h.b16 %v172
    %v513 = vunpack.c.l.b16 %v173
    %v514 = vunpack.c.h.b16 %v173
    %v515 = vunpack.c.l.b16 %v174
    %v516 = vunpack.c.h.b16 %v174
    %v517 = vunpack.c.l.b16 %v175
    %v518 = vunpack.c.h.b16 %v175
    %v519 = vunpack.c.l.b16 %v176
    %v520 = vunpack.c.h.b16 %v176
    %v521 = vunpack.c.l.b16 %v177
    %v522 = vunpack.c.h.b16 %v177
    %v523 = vunpack.c.l.b16 %v178
    %v524 = vunpack.c.h.b16 %v178
    %v525 = vunpack.c.l.b16 %v179
    %v526 = vunpack.c.h.b16 %v179
    %v527 = vunpack.c.l.b16 %v180
    %v528 = vunpack.c.h.b16 %v180
    %v529 = vunpack.c.l.b16 %v181
    %v530 = vunpack.c.h.b16 %v181
    %v531 = vunpack.c.l.b16 %v182
    %v532 = vunpack.c.h.b16 %v182
    %v533 = vunpack.c.l.b16 %v183
    %v534 = vunpack.c.h.b16 %v183
    %v535 = vunpack.c.l.b16 %v184
    %v536 = vunpack.c.h.b16 %v184
    %v537 = vunpack.c.l.b16 %v185
    %v538 = vunpack.c.h.b16 %v185
    %v539 = vunpack.c.l.b16 %v186
    %v540 = vunpack.c.h.b16 %v186
    %v541 = vunpack.c.l.b16 %v187
    %v542 = vunpack.c.h.b16 %v187
    %v543 = vunpack.c.l.b16 %v188
    %v544 = vunpack.c.h.b16 %v188
    %v545 = vunpack.c.l.b16 %v189
    %v546 = vunpack.c.h.b16 %v189
    %v547 = vunpack.c.l.b16 %v190
    %v548 = vunpack.c.h.b16 %v190
    %v549 = vunpack.c.l.b16 %v191
    %v550 = vunpack.c.h.b16 %v191
    %v551 = vunpack.c.l.b16 %v192
    %v552 = vunpack.c.h.b16 %v192
    %v553 = vunpack.c.l.b16 %v193
    %v554 = vunpack.c.h.b16 %v193
    %v555 = vunpack.c.l.b16 %v194
    %v556 = vunpack.c.h.b16 %v194
    %v557 = vunpack.c.l.b16 %v195
    %v558 = vunpack.c.h.b16 %v195
    %v559 = vunpack.c.l.b16 %v196
    %v560 = vunpack.c.h.b16 %v196
    %v561 = vunpack.c.l.b16 %v197
    %v562 = vunpack.c.h.b16 %v197
    %v563 = vunpack.c.l.b16 %v198
    %v564 = vunpack.c.h.b16 %v198
    %v565 = vunpack.c.l.b16 %v199
    %v566 = vunpack.c.h.b16 %v199
    %v567 = vunpack.c.l.b16 %v200
    %v568 = vunpack.c.h.b16 %v200
    %v569 = vunpack.c.l.b16 %v201
    %v570 = vunpack.c.h.b16 %v201
    %v571 = vunpack.c.l.b16 %v202
    %v572 = vunpack.c.h.b16 %v202
    %v573 = vunpack.c.l.b16 %v203
    %v574 = vunpack.c.h.b16 %v203
    %v575 = vunpack.c.l.b16 %v204
    %v576 = vunpack.c.h.b16 %v204
    %v577 = vunpack.c.l.b16 %v205
    %v578 = vunpack.c.h.b16 %v205
    %v579 = vunpack.c.l.b16 %v206
    %v580 = vunpack.c.h.b16 %v206
    %v581 = vunpack.c.l.b16 %v207
    %v582 = vunpack.c.h.b16 %v207
    %v583 = vunpack.c.l.b16 %v208
    %v584 = vunpack.c.h.b16 %v208
    %v585 = vunpack.c.l.b16 %v209
    %v586 = vunpack.c.h.b16 %v209
    %v587 = vunpack.c.l.b16 %v210
    %v588 = vunpack.c.h.b16 %v210
    %v589 = vunpack.c.l.b16 %v211
    %v590 = vunpack.c.h.b16 %v211
    %v591 = vunpack.c.l.b16 %v212
    %v592 = vunpack.c.h.b16 %v212
    %v593 = vunpack.c.l.b16 %v213
    %v594 = vunpack.c.h.b16 %v213
    %v595 = vunpack.c.l.b16 %v214
    %v596 = vunpack.c.h.b16 %v214
    %v597 = vunpack.c.l.b16 %v215
    %v598 = vunpack.c.h.b16 %v215
    %v599 = vunpack.c.l.b16 %v216
    %v600 = vunpack.c.h.b16 %v216
    %v601 = vunpack.c.l.b16 %v217
    %v602 = vunpack.c.h.b16 %v217
    %v603 = vunpack.c.l.b16 %v218
    %v604 = vunpack.c.h.b16 %v218
    %v605 = vunpack.c.l.b16 %v219
    %v606 = vunpack.c.h.b16 %v219
    %v607 = vunpack.c.l.b16 %v220
    %v608 = vunpack.c.h.b16 %v220
    %v609 = vunpack.c.l.b16 %v221
    %v610 = vunpack.c.h.b16 %v221
    %v611 = vunpack.c.l.b16 %v222
    %v612 = vunpack.c.h.b16 %v222
    %v613 = vunpack.c.l.b16 %v223
    %v614 = vunpack.c.h.b16 %v223
    %v615 = vunpack.c.l.b16 %v224
    %v616 = vunpack.c.h.b16 %v224
    %v617 = vunpack.c.l.b16 %v225
    %v618 = vunpack.c.h.b16 %v225
    %v619 = vunpack.c.l.b16 %v226
    %v620 = vunpack.c.h.b16 %v226
    %v621 = vunpack.c.l.b16 %v227
    %v622 = vunpack.c.h.b16 %v227
    %v623 = vunpack.c.l.b16 %v228
    %v624 = vunpack.c.h.b16 %v228
    %v625 = vpack.c.b16 %v371, %v369
    %v626 = vpack.c.b16 %v372, %v370
    %v627 = vpack.c.b16 %v375, %v373
    %v628 = vpack.c.b16 %v376, %v374
    %v629 = vpack.c.b16 %v379, %v377
    %v630 = vpack.c.b16 %v380, %v378
    %v631 = vpack.c.b16 %v383, %v381
    %v632 = vpack.c.b16 %v384, %v382
    %v633 = vpack.c.b16 %v387, %v385
    %v634 = vpack.c.b16 %v388, %v386
    %v635 = vpack.c.b16 %v391, %v389
    %v636 = vpack.c.b16 %v392, %v390
    %v637 = vpack.c.b16 %v395, %v393
    %v638 = vpack.c.b16 %v396, %v394
    %v639 = vpack.c.b16 %v399, %v397
    %v640 = vpack.c.b16 %v400, %v398
    %v641 = vpack.c.b16 %v403, %v401
    %v642 = vpack.c.b16 %v404, %v402
    %v643 = vpack.c.b16 %v407, %v405
    %v644 = vpack.c.b16 %v408, %v406
    %v645 = vpack.c.b16 %v411, %v409
    %v646 = vpack.c.b16 %v412, %v410
    %v647 = vpack.c.b16 %v415, %v413
    %v648 = vpack.c.b16 %v416, %v414
    %v649 = vpack.c.b16 %v419, %v417
    %v650 = vpack.c.b16 %v420, %v418
    %v651 = vpack.c.b16 %v423, %v421
    %v652 = vpack.c.b16 %v424, %v422
    %v653 = vpack.c.b16 %v427, %v425
    %v654 = vpack.c.b16 %v428, %v426
    %v655 = vpack.c.b16 %v431, %v429
    %v656 = vpack.c.b16 %v432, %v430
    %v657 = vpack.c.b16 %v435, %v433
    %v658 = vpack.c.b16 %v436, %v434
    %v659 = vpack.c.b16 %v439, %v437
    %v660 = vpack.c.b16 %v440, %v438
    %v661 = vpack.c.b16 %v443, %v441
    %v662 = vpack.c.b16 %v444, %v442
    %v663 = vpack.c.b16 %v447, %v445
    %v664 = vpack.c.b16 %v448, %v446
    %v665 = vpack.c.b16 %v451, %v449
    %v666 = vpack.c.b16 %v452, %v450
    %v667 = vpack.c.b16 %v455, %v453
    %v668 = vpack.c.b16 %v456, %v454
    %v669 = vpack.c.b16 %v459, %v457
    %v670 = vpack.c.b16 %v460, %v458
    %v671 = vpack.c.b16 %v463, %v461
    %v672 = vpack.c.b16 %v464, %v462
    %v673 = vpack.c.b16 %v467, %v465
    %v674 = vpack.c.b16 %v468, %v466
    %v675 = vpack.c.b16 %v471, %v469
    %v676 = vpack.c.b16 %v472, %v470
    %v677 = vpack.c.b16 %v475, %v473
    %v678 = vpack.c.b16 %v476, %v474
    %v679 = vpack.c.b16 %v479, %v477
    %v680 = vpack.c.b16 %v480, %v478
    %v681 = vpack.c.b16 %v483, %v481
    %v682 = vpack.c.b16 %v484, %v482
    %v683 = vpack.c.b16 %v487, %v485
    %v684 = vpack.c.b16 %v488, %v486
    %v685 = vpack.c.b16 %v491, %v489
    %v686 = vpack.c.b16 %v492, %v490
    %v687 = vpack.c.b16 %v495, %v493
    %v688 = vpack.c.b16 %v496, %v494
    %v689 = vpack.c.b16 %v499, %v497
    %v690 = vpack.c.b16 %v500, %v498
    %v691 = vpack.c.b16 %v503, %v501
    %v692 = vpack.c.b16 %v504, %v502
    %v693 = vpack.c.b16 %v507, %v505
    %v694 = vpack.c.b16 %v508, %v506
    %v695 = vpack.c.b16 %v511, %v509
    %v696 = vpack.c.b16 %v512, %v510
    %v697 = vpack.c.b16 %v515, %v513
    %v698 = vpack.c.b16 %v516, %v514
    %v699 = vpack.c.b16 %v519, %v517
    %v700 = vpack.c.b16 %v520, %v518
    %v701 = vpack.c.b16 %v523, %v521
    %v702 = vpack.c.b16 %v524, %v522
    %v703 = vpack.c.b16 %v527, %v525
    %v704 = vpack.c.b16 %v528, %v526
    %v705 = vpack.c.b16 %v531, %v529
    %v706 = vpack.c.b16 %v532, %v530
    %v707 = vpack.c.b16 %v535, %v533
    %v708 = vpack.c.b16 %v536, %v534
    %v709 = vpack.c.b16 %v539, %v537
    %v710 = vpack.c.b16 %v540, %v538
    %v711 = vpack.c.b16 %v543, %v541
    %v712 = vpack.c.b16 %v544, %v542
    %v713 = vpack.c.b16 %v547, %v545
    %v714 = vpack.c.b16 %v548, %v546
    %v715 = vpack.c.b16 %v551, %v549
    %v716 = vpack.c.b16 %v552, %v550
    %v717 = vpack.c.b16 %v555, %v553
    %v718 = vpack.c.b16 %v556, %v554
    %v719 = vpack.c.b16 %v559, %v557
    %v720 = vpack.c.b16 %v560, %v558
    %v721 = vpack.c.b16 %v563, %v561
    %v722 = vpack.c.b16 %v564, %v562
    %v723 = vpack.c.b16 %v567, %v565
    %v724 = vpack.c.b16 %v568, %v566
    %v725 = vpack.c.b16 %v571, %v569
    %v726 = vpack.c.b16 %v572, %v570
    %v727 = vpack.c.b16 %v575, %v573
    %v728 = vpack.c.b16 %v576, %v574
    %v729 = vpack.c.b16 %v579, %v577
    %v730 = vpack.c.b16 %v580, %v578
    %v731 = vpack.c.b16 %v583, %v581
    %v732 = vpack.c.b16 %v584, %v582
    %v733 = vpack.c.b16 %v587, %v585
    %v734 = vpack.c.b16 %v588, %v586
    %v735 = vpack.c.b16 %v591, %v589
    %v736 = vpack.c.b16 %v592, %v590
    %v737 = vpack.c.b16 %v595, %v593
    %v738 = vpack.c.b16 %v596, %v594
    %v739 = vpack.c.b16 %v599, %v597
    %v740 = vpack.c.b16 %v600, %v598
    %v741 = vpack.c.b16 %v603, %v601
    %v742 = vpack.c.b16 %v604, %v602
    %v743 = vpack.c.b16 %v607, %v605
    %v744 = vpack.c.b16 %v608, %v606
    %v745 = vpack.c.b16 %v611, %v609
    %v746 = vpack.c.b16 %v612, %v610
    %v747 = vpack.c.b16 %v615, %v613
    %v748 = vpack.c.b16 %v616, %v614
    %v749 = vpack.c.b16 %v619, %v617
    %v750 = vpack.c.b16 %v620, %v618
    %v751 = vpack.c.b16 %v623, %v621
    %v752 = vpack.c.b16 %v624, %v622
    %881 = vmatprep.subr.bf16.mxu0 %v626
    %882 = vmatpush1.bf16.msra.mxu0 %v625
    %883 = vmatprep.subr.bf16.mxu0 %v628
    %884 = vmatpush1.bf16.msra.mxu0 %v627
    %885 = vmatprep.subr.bf16.mxu0 %v630
    %886 = vmatpush1.bf16.msra.mxu0 %v629
    %887 = vmatprep.subr.bf16.mxu0 %v632
    %888 = vmatpush1.bf16.msra.mxu0 %v631
    %889 = vmatprep.subr.bf16.mxu0 %v634
    %890 = vmatpush1.bf16.msra.mxu0 %v633
    %891 = vmatprep.subr.bf16.mxu0 %v636
    %892 = vmatpush1.bf16.msra.mxu0 %v635
    %893 = vmatprep.subr.bf16.mxu0 %v638
    %894 = vmatpush1.bf16.msra.mxu0 %v637
    %895 = vmatprep.subr.bf16.mxu0 %v640
    %896 = vmatpush1.bf16.msra.mxu0 %v639
    %897 = vmatprep.subr.bf16.mxu0 %v642
    %898 = vmatpush1.bf16.msra.mxu0 %v641
    %899 = vmatprep.subr.bf16.mxu0 %v644
    %900 = vmatpush1.bf16.msra.mxu0 %v643
    %901 = vmatprep.subr.bf16.mxu0 %v646
    %902 = vmatpush1.bf16.msra.mxu0 %v645
    %903 = vmatprep.subr.bf16.mxu0 %v648
    %904 = vmatpush1.bf16.msra.mxu0 %v647
    %905 = vmatprep.subr.bf16.mxu0 %v650
    %906 = vmatpush1.bf16.msra.mxu0 %v649
    %907 = vmatprep.subr.bf16.mxu0 %v652
    %908 = vmatpush1.bf16.msra.mxu0 %v651
    %909 = vmatprep.subr.bf16.mxu0 %v654
    %910 = vmatpush1.bf16.msra.mxu0 %v653
    %911 = vmatprep.subr.bf16.mxu0 %v656
    %912 = vmatpush1.bf16.msra.mxu0 %v655
    %913 = vmatprep.mubr.bf16.mxu0 %v94
    %914 = vmatmul.mubr.bf16.gmra.mrb[0].mxu0 %v93
    %v915 = vpop.f32.mrb[0].mxu0
    %v916 = vadd.f32 %v234, %v915
    %v917 = vpop.f32.mrb[0].mxu0
    %v918 = vadd.f32 %v238, %v917
    %v919 = vpop.f32.mrb[0].mxu0
    %v920 = vpop.f32.mrb[0].mxu0
    %921 = vdwg.mxu0
    %922 = vmatprep.subr.bf16.mxu0 %v658
    %923 = vmatpush1.bf16.msra.mxu0 %v657
    %924 = vmatprep.subr.bf16.mxu0 %v660
    %925 = vmatpush1.bf16.msra.mxu0 %v659
    %926 = vmatprep.subr.bf16.mxu0 %v662
    %927 = vmatpush1.bf16.msra.mxu0 %v661
    %928 = vmatprep.subr.bf16.mxu0 %v664
    %929 = vmatpush1.bf16.msra.mxu0 %v663
    %930 = vmatprep.subr.bf16.mxu0 %v666
    %931 = vmatpush1.bf16.msra.mxu0 %v665
    %932 = vmatprep.subr.bf16.mxu0 %v668
    %933 = vmatpush1.bf16.msra.mxu0 %v667
    %934 = vmatprep.subr.bf16.mxu0 %v670
    %935 = vmatpush1.bf16.msra.mxu0 %v669
    %936 = vmatprep.subr.bf16.mxu0 %v672
    %937 = vmatpush1.bf16.msra.mxu0 %v671
    %938 = vmatprep.subr.bf16.mxu0 %v674
    %939 = vmatpush1.bf16.msra.mxu0 %v673
    %940 = vmatprep.subr.bf16.mxu0 %v676
    %941 = vmatpush1.bf16.msra.mxu0 %v675
    %942 = vmatprep.subr.bf16.mxu0 %v678
    %943 = vmatpush1.bf16.msra.mxu0 %v677
    %944 = vmatprep.subr.bf16.mxu0 %v680
    %945 = vmatpush1.bf16.msra.mxu0 %v679
    %946 = vmatprep.subr.bf16.mxu0 %v682
    %947 = vmatpush1.bf16.msra.mxu0 %v681
    %948 = vmatprep.subr.bf16.mxu0 %v684
    %949 = vmatpush1.bf16.msra.mxu0 %v683
    %950 = vmatprep.subr.bf16.mxu0 %v686
    %951 = vmatpush1.bf16.msra.mxu0 %v685
    %952 = vmatprep.subr.bf16.mxu0 %v688
    %953 = vmatpush1.bf16.msra.mxu0 %v687
    %954 = vmatprep.mubr.bf16.mxu0 %v96
    %955 = vmatmul.mubr.bf16.gmra.mrb[0].mxu0 %v95
    %v956 = vpop.f32.mrb[0].mxu0
    %v957 = vadd.f32 %v916, %v956
    %v958 = vpop.f32.mrb[0].mxu0
    %v959 = vadd.f32 %v918, %v958
    %v960 = vpop.f32.mrb[0].mxu0
    %v961 = vpop.f32.mrb[0].mxu0
    %962 = vdwg.mxu0
    %963 = vmatprep.subr.bf16.mxu0 %v690
    %964 = vmatpush1.bf16.msra.mxu0 %v689
    %965 = vmatprep.subr.bf16.mxu0 %v692
    %966 = vmatpush1.bf16.msra.mxu0 %v691
    %967 = vmatprep.subr.bf16.mxu0 %v694
    %968 = vmatpush1.bf16.msra.mxu0 %v693
    %969 = vmatprep.subr.bf16.mxu0 %v696
    %970 = vmatpush1.bf16.msra.mxu0 %v695
    %971 = vmatprep.subr.bf16.mxu0 %v698
    %972 = vmatpush1.bf16.msra.mxu0 %v697
    %973 = vmatprep.subr.bf16.mxu0 %v700
    %974 = vmatpush1.bf16.msra.mxu0 %v699
    %975 = vmatprep.subr.bf16.mxu0 %v702
    %976 = vmatpush1.bf16.msra.mxu0 %v701
    %977 = vmatprep.subr.bf16.mxu0 %v704
    %978 = vmatpush1.bf16.msra.mxu0 %v703
    %979 = vmatprep.subr.bf16.mxu0 %v706
    %980 = vmatpush1.bf16.msra.mxu0 %v705
    %981 = vmatprep.subr.bf16.mxu0 %v708
    %982 = vmatpush1.bf16.msra.mxu0 %v707
    %983 = vmatprep.subr.bf16.mxu0 %v710
    %984 = vmatpush1.bf16.msra.mxu0 %v709
    %985 = vmatprep.subr.bf16.mxu0 %v712
    %986 = vmatpush1.bf16.msra.mxu0 %v711
    %987 = vmatprep.subr.bf16.mxu0 %v714
    %988 = vmatpush1.bf16.msra.mxu0 %v713
    %989 = vmatprep.subr.bf16.mxu0 %v716
    %990 = vmatpush1.bf16.msra.mxu0 %v715
    %991 = vmatprep.subr.bf16.mxu0 %v718
    %992 = vmatpush1.bf16.msra.mxu0 %v717
    %993 = vmatprep.subr.bf16.mxu0 %v720
    %994 = vmatpush1.bf16.msra.mxu0 %v719
    %995 = vmatprep.mubr.bf16.mxu0 %v98
    %996 = vmatmul.mubr.bf16.gmra.mrb[0].mxu0 %v97
    %v997 = vpop.f32.mrb[0].mxu0
    %v998 = vadd.f32 %v957, %v997
    %v999 = vpop.f32.mrb[0].mxu0
    %v1000 = vadd.f32 %v959, %v999
    %v1001 = vpop.f32.mrb[0].mxu0
    %v1002 = vpop.f32.mrb[0].mxu0
    %1003 = vdwg.mxu0
    %1004 = vmatprep.subr.bf16.mxu0 %v722
    %1005 = vmatpush1.bf16.msra.mxu0 %v721
    %1006 = vmatprep.subr.bf16.mxu0 %v724
    %1007 = vmatpush1.bf16.msra.mxu0 %v723
    %1008 = vmatprep.subr.bf16.mxu0 %v726
    %1009 = vmatpush1.bf16.msra.mxu0 %v725
    %1010 = vmatprep.subr.bf16.mxu0 %v728
    %1011 = vmatpush1.bf16.msra.mxu0 %v727
    %1012 = vmatprep.subr.bf16.mxu0 %v730
    %1013 = vmatpush1.bf16.msra.mxu0 %v729
    %1014 = vmatprep.subr.bf16.mxu0 %v732
    %1015 = vmatpush1.bf16.msra.mxu0 %v731
    %1016 = vmatprep.subr.bf16.mxu0 %v734
    %1017 = vmatpush1.bf16.msra.mxu0 %v733
    %1018 = vmatprep.subr.bf16.mxu0 %v736
    %1019 = vmatpush1.bf16.msra.mxu0 %v735
    %1020 = vmatprep.subr.bf16.mxu0 %v738
    %1021 = vmatpush1.bf16.msra.mxu0 %v737
    %1022 = vmatprep.subr.bf16.mxu0 %v740
    %1023 = vmatpush1.bf16.msra.mxu0 %v739
    %1024 = vmatprep.subr.bf16.mxu0 %v742
    %1025 = vmatpush1.bf16.msra.mxu0 %v741
    %1026 = vmatprep.subr.bf16.mxu0 %v744
    %1027 = vmatpush1.bf16.msra.mxu0 %v743
    %1028 = vmatprep.subr.bf16.mxu0 %v746
    %1029 = vmatpush1.bf16.msra.mxu0 %v745
    %1030 = vmatprep.subr.bf16.mxu0 %v748
    %1031 = vmatpush1.bf16.msra.mxu0 %v747
    %1032 = vmatprep.subr.bf16.mxu0 %v750
    %1033 = vmatpush1.bf16.msra.mxu0 %v749
    %1034 = vmatprep.subr.bf16.mxu0 %v752
    %1035 = vmatpush1.bf16.msra.mxu0 %v751
    %1036 = vmatprep.mubr.bf16.mxu0 %v100
    %1037 = vmatmul.mubr.bf16.gmra.mrb[0].mxu0 %v99
    %v1038 = vpop.f32.mrb[0].mxu0
    %v1039 = vadd.f32 %v998, %v1038
    %v1040 = vpop.f32.mrb[0].mxu0
    %v1041 = vadd.f32 %v1000, %v1040
    %v1042 = vpop.f32.mrb[0].mxu0
    %v1043 = vpop.f32.mrb[0].mxu0
    %1044 = vdwg.mxu0
    %v1045 = vmax.f32 %v1039, 0.0
    %v1046 = vmax.f32 %v1041, 0.0
    %v1047 = vpack.c.bf16 %v1045, %v1045
    %v1048 = vpack.c.bf16 %v1046, %v1046
    %v1049 = vld [vmem:[#allocation7] sm:$0xff]
    %v1050 = vld [vmem:[#allocation7 + $0x8] sm:$0xff]
    %v1051 = vld [vmem:[#allocation7 + $0x10] sm:$0xff]
    %v1052 = vld [vmem:[#allocation7 + $0x18] sm:$0xff]
    %v1053 = vld [vmem:[#allocation7 + $0x20] sm:$0xff]
    %v1054 = vld [vmem:[#allocation7 + $0x28] sm:$0xff]
    %v1055 = vld [vmem:[#allocation7 + $0x30] sm:$0xff]
    %v1056 = vld [vmem:[#allocation7 + $0x38] sm:$0xff]
    %v1057 = vld [vmem:[#allocation7 + $0x40] sm:$0xff]
    %v1058 = vld [vmem:[#allocation7 + $0x48] sm:$0xff]
    %v1059 = vld [vmem:[#allocation7 + $0x50] sm:$0xff]
    %v1060 = vld [vmem:[#allocation7 + $0x58] sm:$0xff]
    %v1061 = vld [vmem:[#allocation7 + $0x60] sm:$0xff]
    %v1062 = vld [vmem:[#allocation7 + $0x68] sm:$0xff]
    %v1063 = vld [vmem:[#allocation7 + $0x70] sm:$0xff]
    %v1064 = vld [vmem:[#allocation7 + $0x78] sm:$0xff]
    %v1065 = vld [vmem:[#allocation7 + $0x80] sm:$0xff]
    %v1066 = vld [vmem:[#allocation7 + $0x88] sm:$0xff]
    %v1067 = vld [vmem:[#allocation7 + $0x90] sm:$0xff]
    %v1068 = vld [vmem:[#allocation7 + $0x98] sm:$0xff]
    %v1069 = vld [vmem:[#allocation7 + $0xa0] sm:$0xff]
    %v1070 = vld [vmem:[#allocation7 + $0xa8] sm:$0xff]
    %v1071 = vld [vmem:[#allocation7 + $0xb0] sm:$0xff]
    %v1072 = vld [vmem:[#allocation7 + $0xb8] sm:$0xff]
    %v1073 = vld [vmem:[#allocation7 + $0xc0] sm:$0xff]
    %v1074 = vld [vmem:[#allocation7 + $0xc8] sm:$0xff]
    %v1075 = vld [vmem:[#allocation7 + $0xd0] sm:$0xff]
    %v1076 = vld [vmem:[#allocation7 + $0xd8] sm:$0xff]
    %v1077 = vld [vmem:[#allocation7 + $0xe0] sm:$0xff]
    %v1078 = vld [vmem:[#allocation7 + $0xe8] sm:$0xff]
    %v1079 = vld [vmem:[#allocation7 + $0xf0] sm:$0xff]
    %v1080 = vld [vmem:[#allocation7 + $0xf8] sm:$0xff]
    %v1081 = vld [vmem:[%s4] sm:$0x3]
    %v1083 = vlaneseq
    %v1084 = vshrl.u32 %v1083, 7
    %v1085 = vsub.s32 0, %v1084
    %v1086 = vrot.slane %v1081, %v1085
    %v1087 = vlaneseq
    %v1088 = vshrl.u32 %v1087, 7
    %v1089 = vsub.s32 1, %v1088
    %v1090 = vrot.slane %v1081, %v1089
    %v1125 = vunpack.c.l.b16 %v1049
    %v1126 = vunpack.c.h.b16 %v1049
    %v1127 = vunpack.c.l.b16 %v1050
    %v1128 = vunpack.c.h.b16 %v1050
    %v1129 = vunpack.c.l.b16 %v1051
    %v1130 = vunpack.c.h.b16 %v1051
    %v1131 = vunpack.c.l.b16 %v1052
    %v1132 = vunpack.c.h.b16 %v1052
    %v1133 = vunpack.c.l.b16 %v1053
    %v1134 = vunpack.c.h.b16 %v1053
    %v1135 = vunpack.c.l.b16 %v1054
    %v1136 = vunpack.c.h.b16 %v1054
    %v1137 = vunpack.c.l.b16 %v1055
    %v1138 = vunpack.c.h.b16 %v1055
    %v1139 = vunpack.c.l.b16 %v1056
    %v1140 = vunpack.c.h.b16 %v1056
    %v1141 = vunpack.c.l.b16 %v1057
    %v1142 = vunpack.c.h.b16 %v1057
    %v1143 = vunpack.c.l.b16 %v1058
    %v1144 = vunpack.c.h.b16 %v1058
    %v1145 = vunpack.c.l.b16 %v1059
    %v1146 = vunpack.c.h.b16 %v1059
    %v1147 = vunpack.c.l.b16 %v1060
    %v1148 = vunpack.c.h.b16 %v1060
    %v1149 = vunpack.c.l.b16 %v1061
    %v1150 = vunpack.c.h.b16 %v1061
    %v1151 = vunpack.c.l.b16 %v1062
    %v1152 = vunpack.c.h.b16 %v1062
    %v1153 = vunpack.c.l.b16 %v1063
    %v1154 = vunpack.c.h.b16 %v1063
    %v1155 = vunpack.c.l.b16 %v1064
    %v1156 = vunpack.c.h.b16 %v1064
    %v1157 = vunpack.c.l.b16 %v1065
    %v1158 = vunpack.c.h.b16 %v1065
    %v1159 = vunpack.c.l.b16 %v1066
    %v1160 = vunpack.c.h.b16 %v1066
    %v1161 = vunpack.c.l.b16 %v1067
    %v1162 = vunpack.c.h.b16 %v1067
    %v1163 = vunpack.c.l.b16 %v1068
    %v1164 = vunpack.c.h.b16 %v1068
    %v1165 = vunpack.c.l.b16 %v1069
    %v1166 = vunpack.c.h.b16 %v1069
    %v1167 = vunpack.c.l.b16 %v1070
    %v1168 = vunpack.c.h.b16 %v1070
    %v1169 = vunpack.c.l.b16 %v1071
    %v1170 = vunpack.c.h.b16 %v1071
    %v1171 = vunpack.c.l.b16 %v1072
    %v1172 = vunpack.c.h.b16 %v1072
    %v1173 = vunpack.c.l.b16 %v1073
    %v1174 = vunpack.c.h.b16 %v1073
    %v1175 = vunpack.c.l.b16 %v1074
    %v1176 = vunpack.c.h.b16 %v1074
    %v1177 = vunpack.c.l.b16 %v1075
    %v1178 = vunpack.c.h.b16 %v1075
    %v1179 = vunpack.c.l.b16 %v1076
    %v1180 = vunpack.c.h.b16 %v1076
    %v1181 = vunpack.c.l.b16 %v1077
    %v1182 = vunpack.c.h.b16 %v1077
    %v1183 = vunpack.c.l.b16 %v1078
    %v1184 = vunpack.c.h.b16 %v1078
    %v1185 = vunpack.c.l.b16 %v1079
    %v1186 = vunpack.c.h.b16 %v1079
    %v1187 = vunpack.c.l.b16 %v1080
    %v1188 = vunpack.c.h.b16 %v1080
    %v1189 = vpack.c.b16 %v1127, %v1125
    %v1190 = vpack.c.b16 %v1128, %v1126
    %v1191 = vpack.c.b16 %v1131, %v1129
    %v1192 = vpack.c.b16 %v1132, %v1130
    %v1193 = vpack.c.b16 %v1135, %v1133
    %v1194 = vpack.c.b16 %v1136, %v1134
    %v1195 = vpack.c.b16 %v1139, %v1137
    %v1196 = vpack.c.b16 %v1140, %v1138
    %v1197 = vpack.c.b16 %v1143, %v1141
    %v1198 = vpack.c.b16 %v1144, %v1142
    %v1199 = vpack.c.b16 %v1147, %v1145
    %v1200 = vpack.c.b16 %v1148, %v1146
    %v1201 = vpack.c.b16 %v1151, %v1149
    %v1202 = vpack.c.b16 %v1152, %v1150
    %v1203 = vpack.c.b16 %v1155, %v1153
    %v1204 = vpack.c.b16 %v1156, %v1154
    %v1205 = vpack.c.b16 %v1159, %v1157
    %v1206 = vpack.c.b16 %v1160, %v1158
    %v1207 = vpack.c.b16 %v1163, %v1161
    %v1208 = vpack.c.b16 %v1164, %v1162
    %v1209 = vpack.c.b16 %v1167, %v1165
    %v1210 = vpack.c.b16 %v1168, %v1166
    %v1211 = vpack.c.b16 %v1171, %v1169
    %v1212 = vpack.c.b16 %v1172, %v1170
    %v1213 = vpack.c.b16 %v1175, %v1173
    %v1214 = vpack.c.b16 %v1176, %v1174
    %v1215 = vpack.c.b16 %v1179, %v1177
    %v1216 = vpack.c.b16 %v1180, %v1178
    %v1217 = vpack.c.b16 %v1183, %v1181
    %v1218 = vpack.c.b16 %v1184, %v1182
    %v1219 = vpack.c.b16 %v1187, %v1185
    %v1220 = vpack.c.b16 %v1188, %v1186
    %1253 = vmatprep.subr.bf16.mxu0 %v1190
    %1254 = vmatpush1.bf16.msra.mxu0 %v1189
    %1255 = vmatprep.subr.bf16.mxu0 %v1192
    %1256 = vmatpush1.bf16.msra.mxu0 %v1191
    %1257 = vmatprep.subr.bf16.mxu0 %v1194
    %1258 = vmatpush1.bf16.msra.mxu0 %v1193
    %1259 = vmatprep.subr.bf16.mxu0 %v1196
    %1260 = vmatpush1.bf16.msra.mxu0 %v1195
    %1261 = vmatprep.subr.bf16.mxu0 %v1198
    %1262 = vmatpush1.bf16.msra.mxu0 %v1197
    %1263 = vmatprep.subr.bf16.mxu0 %v1200
    %1264 = vmatpush1.bf16.msra.mxu0 %v1199
    %1265 = vmatprep.subr.bf16.mxu0 %v1202
    %1266 = vmatpush1.bf16.msra.mxu0 %v1201
    %1267 = vmatprep.subr.bf16.mxu0 %v1204
    %1268 = vmatpush1.bf16.msra.mxu0 %v1203
    %1269 = vmatprep.subr.bf16.mxu0 %v1206
    %1270 = vmatpush1.bf16.msra.mxu0 %v1205
    %1271 = vmatprep.subr.bf16.mxu0 %v1208
    %1272 = vmatpush1.bf16.msra.mxu0 %v1207
    %1273 = vmatprep.subr.bf16.mxu0 %v1210
    %1274 = vmatpush1.bf16.msra.mxu0 %v1209
    %1275 = vmatprep.subr.bf16.mxu0 %v1212
    %1276 = vmatpush1.bf16.msra.mxu0 %v1211
    %1277 = vmatprep.subr.bf16.mxu0 %v1214
    %1278 = vmatpush1.bf16.msra.mxu0 %v1213
    %1279 = vmatprep.subr.bf16.mxu0 %v1216
    %1280 = vmatpush1.bf16.msra.mxu0 %v1215
    %1281 = vmatprep.subr.bf16.mxu0 %v1218
    %1282 = vmatpush1.bf16.msra.mxu0 %v1217
    %1283 = vmatprep.subr.bf16.mxu0 %v1220
    %1284 = vmatpush1.bf16.msra.mxu0 %v1219
    %1285 = vmatprep.mubr.bf16.mxu0 %v1048
    %1286 = vmatmul.mubr.bf16.gmra.mrb[0].mxu0 %v1047
    %v1287 = vpop.f32.mrb[0].mxu0
    %v1288 = vadd.f32 %v1086, %v1287
    %v1289 = vpop.f32.mrb[0].mxu0
    %v1290 = vadd.f32 %v1090, %v1289
    %v1291 = vpop.f32.mrb[0].mxu0
    %v1292 = vpop.f32.mrb[0].mxu0
    %1293 = vdwg.mxu0
    %v1294 = vmax.f32 %v1288, 0.0
    %v1295 = vmax.f32 %v1290, 0.0
    %v1296 = vpack.c.bf16 %v1294, %v1294
    %v1297 = vpack.c.bf16 %v1295, %v1295
    %v1298 = vld [vmem:[#allocation8] sm:$0xff]
    %v1299 = vld [vmem:[#allocation8 + $0x8] sm:$0xff]
    %v1300 = vld [vmem:[#allocation8 + $0x10] sm:$0xff]
    %v1301 = vld [vmem:[#allocation8 + $0x18] sm:$0xff]
    %v1302 = vld [vmem:[#allocation8 + $0x20] sm:$0xff]
    %v1303 = vld [vmem:[#allocation8 + $0x28] sm:$0xff]
    %v1304 = vld [vmem:[#allocation8 + $0x30] sm:$0xff]
    %v1305 = vld [vmem:[#allocation8 + $0x38] sm:$0xff]
    %v1306 = vld [vmem:[#allocation8 + $0x40] sm:$0xff]
    %v1307 = vld [vmem:[#allocation8 + $0x48] sm:$0xff]
    %v1308 = vld [vmem:[#allocation8 + $0x50] sm:$0xff]
    %v1309 = vld [vmem:[#allocation8 + $0x58] sm:$0xff]
    %v1310 = vld [vmem:[#allocation8 + $0x60] sm:$0xff]
    %v1311 = vld [vmem:[#allocation8 + $0x68] sm:$0xff]
    %v1312 = vld [vmem:[#allocation8 + $0x70] sm:$0xff]
    %v1313 = vld [vmem:[#allocation8 + $0x78] sm:$0xff]
    %v1314 = vld [vmem:[#allocation8 + $0x80] sm:$0xff]
    %v1315 = vld [vmem:[#allocation8 + $0x88] sm:$0xff]
    %v1316 = vld [vmem:[#allocation8 + $0x90] sm:$0xff]
    %v1317 = vld [vmem:[#allocation8 + $0x98] sm:$0xff]
    %v1318 = vld [vmem:[#allocation8 + $0xa0] sm:$0xff]
    %v1319 = vld [vmem:[#allocation8 + $0xa8] sm:$0xff]
    %v1320 = vld [vmem:[#allocation8 + $0xb0] sm:$0xff]
    %v1321 = vld [vmem:[#allocation8 + $0xb8] sm:$0xff]
    %v1322 = vld [vmem:[#allocation8 + $0xc0] sm:$0xff]
    %v1323 = vld [vmem:[#allocation8 + $0xc8] sm:$0xff]
    %v1324 = vld [vmem:[#allocation8 + $0xd0] sm:$0xff]
    %v1325 = vld [vmem:[#allocation8 + $0xd8] sm:$0xff]
    %v1326 = vld [vmem:[#allocation8 + $0xe0] sm:$0xff]
    %v1327 = vld [vmem:[#allocation8 + $0xe8] sm:$0xff]
    %v1328 = vld [vmem:[#allocation8 + $0xf0] sm:$0xff]
    %v1329 = vld [vmem:[#allocation8 + $0xf8] sm:$0xff]
    %v1330 = vld [vmem:[#allocation8 + $0x100] sm:$0xff]
    %v1331 = vld [vmem:[#allocation8 + $0x108] sm:$0xff]
    %v1332 = vld [vmem:[#allocation8 + $0x110] sm:$0xff]
    %v1333 = vld [vmem:[#allocation8 + $0x118] sm:$0xff]
    %v1334 = vld [vmem:[#allocation8 + $0x120] sm:$0xff]
    %v1335 = vld [vmem:[#allocation8 + $0x128] sm:$0xff]
    %v1336 = vld [vmem:[#allocation8 + $0x130] sm:$0xff]
    %v1337 = vld [vmem:[#allocation8 + $0x138] sm:$0xff]
    %v1338 = vld [vmem:[#allocation8 + $0x140] sm:$0xff]
    %v1339 = vld [vmem:[#allocation8 + $0x148] sm:$0xff]
    %v1340 = vld [vmem:[#allocation8 + $0x150] sm:$0xff]
    %v1341 = vld [vmem:[#allocation8 + $0x158] sm:$0xff]
    %v1342 = vld [vmem:[#allocation8 + $0x160] sm:$0xff]
    %v1343 = vld [vmem:[#allocation8 + $0x168] sm:$0xff]
    %v1344 = vld [vmem:[#allocation8 + $0x170] sm:$0xff]
    %v1345 = vld [vmem:[#allocation8 + $0x178] sm:$0xff]
    %v1346 = vld [vmem:[#allocation8 + $0x180] sm:$0xff]
    %v1347 = vld [vmem:[#allocation8 + $0x188] sm:$0xff]
    %v1348 = vld [vmem:[#allocation8 + $0x190] sm:$0xff]
    %v1349 = vld [vmem:[#allocation8 + $0x198] sm:$0xff]
    %v1350 = vld [vmem:[#allocation8 + $0x1a0] sm:$0xff]
    %v1351 = vld [vmem:[#allocation8 + $0x1a8] sm:$0xff]
    %v1352 = vld [vmem:[#allocation8 + $0x1b0] sm:$0xff]
    %v1353 = vld [vmem:[#allocation8 + $0x1b8] sm:$0xff]
    %v1354 = vld [vmem:[#allocation8 + $0x1c0] sm:$0xff]
    %v1355 = vld [vmem:[#allocation8 + $0x1c8] sm:$0xff]
    %v1356 = vld [vmem:[#allocation8 + $0x1d0] sm:$0xff]
    %v1357 = vld [vmem:[#allocation8 + $0x1d8] sm:$0xff]
    %v1358 = vld [vmem:[#allocation8 + $0x1e0] sm:$0xff]
    %v1359 = vld [vmem:[#allocation8 + $0x1e8] sm:$0xff]
    %v1360 = vld [vmem:[#allocation8 + $0x1f0] sm:$0xff]
    %v1361 = vld [vmem:[#allocation8 + $0x1f8] sm:$0xff]
    %v1362 = vld [vmem:[#allocation8 + $0x200] sm:$0xff]
    %v1363 = vld [vmem:[#allocation8 + $0x208] sm:$0xff]
    %v1364 = vld [vmem:[#allocation8 + $0x210] sm:$0xff]
    %v1365 = vld [vmem:[#allocation8 + $0x218] sm:$0xff]
    %v1366 = vld [vmem:[#allocation8 + $0x220] sm:$0xff]
    %v1367 = vld [vmem:[#allocation8 + $0x228] sm:$0xff]
    %v1368 = vld [vmem:[#allocation8 + $0x230] sm:$0xff]
    %v1369 = vld [vmem:[#allocation8 + $0x238] sm:$0xff]
    %v1370 = vld [vmem:[#allocation8 + $0x240] sm:$0xff]
    %v1371 = vld [vmem:[#allocation8 + $0x248] sm:$0xff]
    %v1372 = vld [vmem:[#allocation8 + $0x250] sm:$0xff]
    %v1373 = vld [vmem:[#allocation8 + $0x258] sm:$0xff]
    %v1374 = vld [vmem:[#allocation8 + $0x260] sm:$0xff]
    %v1375 = vld [vmem:[#allocation8 + $0x268] sm:$0xff]
    %v1376 = vld [vmem:[#allocation8 + $0x270] sm:$0xff]
    %v1377 = vld [vmem:[#allocation8 + $0x278] sm:$0xff]
    %v1378 = vld [vmem:[#allocation8 + $0x280] sm:$0xff]
    %v1379 = vld [vmem:[#allocation8 + $0x288] sm:$0xff]
    %v1380 = vld [vmem:[#allocation8 + $0x290] sm:$0xff]
    %v1381 = vld [vmem:[#allocation8 + $0x298] sm:$0xff]
    %v1382 = vld [vmem:[#allocation8 + $0x2a0] sm:$0xff]
    %v1383 = vld [vmem:[#allocation8 + $0x2a8] sm:$0xff]
    %v1384 = vld [vmem:[#allocation8 + $0x2b0] sm:$0xff]
    %v1385 = vld [vmem:[#allocation8 + $0x2b8] sm:$0xff]
    %v1386 = vld [vmem:[#allocation8 + $0x2c0] sm:$0xff]
    %v1387 = vld [vmem:[#allocation8 + $0x2c8] sm:$0xff]
    %v1388 = vld [vmem:[#allocation8 + $0x2d0] sm:$0xff]
    %v1389 = vld [vmem:[#allocation8 + $0x2d8] sm:$0xff]
    %v1390 = vld [vmem:[#allocation8 + $0x2e0] sm:$0xff]
    %v1391 = vld [vmem:[#allocation8 + $0x2e8] sm:$0xff]
    %v1392 = vld [vmem:[#allocation8 + $0x2f0] sm:$0xff]
    %v1393 = vld [vmem:[#allocation8 + $0x2f8] sm:$0xff]
    %v1394 = vld [vmem:[#allocation8 + $0x300] sm:$0xff]
    %v1395 = vld [vmem:[#allocation8 + $0x308] sm:$0xff]
    %v1396 = vld [vmem:[#allocation8 + $0x310] sm:$0xff]
    %v1397 = vld [vmem:[#allocation8 + $0x318] sm:$0xff]
    %v1398 = vld [vmem:[#allocation8 + $0x320] sm:$0xff]
    %v1399 = vld [vmem:[#allocation8 + $0x328] sm:$0xff]
    %v1400 = vld [vmem:[#allocation8 + $0x330] sm:$0xff]
    %v1401 = vld [vmem:[#allocation8 + $0x338] sm:$0xff]
    %v1402 = vld [vmem:[#allocation8 + $0x340] sm:$0xff]
    %v1403 = vld [vmem:[#allocation8 + $0x348] sm:$0xff]
    %v1404 = vld [vmem:[#allocation8 + $0x350] sm:$0xff]
    %v1405 = vld [vmem:[#allocation8 + $0x358] sm:$0xff]
    %v1406 = vld [vmem:[#allocation8 + $0x360] sm:$0xff]
    %v1407 = vld [vmem:[#allocation8 + $0x368] sm:$0xff]
    %v1408 = vld [vmem:[#allocation8 + $0x370] sm:$0xff]
    %v1409 = vld [vmem:[#allocation8 + $0x378] sm:$0xff]
    %v1410 = vld [vmem:[#allocation8 + $0x380] sm:$0xff]
    %v1411 = vld [vmem:[#allocation8 + $0x388] sm:$0xff]
    %v1412 = vld [vmem:[#allocation8 + $0x390] sm:$0xff]
    %v1413 = vld [vmem:[#allocation8 + $0x398] sm:$0xff]
    %v1414 = vld [vmem:[#allocation8 + $0x3a0] sm:$0xff]
    %v1415 = vld [vmem:[#allocation8 + $0x3a8] sm:$0xff]
    %v1416 = vld [vmem:[#allocation8 + $0x3b0] sm:$0xff]
    %v1417 = vld [vmem:[#allocation8 + $0x3b8] sm:$0xff]
    %v1418 = vld [vmem:[#allocation8 + $0x3c0] sm:$0xff]
    %v1419 = vld [vmem:[#allocation8 + $0x3c8] sm:$0xff]
    %v1420 = vld [vmem:[#allocation8 + $0x3d0] sm:$0xff]
    %v1421 = vld [vmem:[#allocation8 + $0x3d8] sm:$0xff]
    %v1422 = vld [vmem:[#allocation8 + $0x3e0] sm:$0xff]
    %v1423 = vld [vmem:[#allocation8 + $0x3e8] sm:$0xff]
    %v1424 = vld [vmem:[#allocation8 + $0x3f0] sm:$0xff]
    %v1425 = vld [vmem:[#allocation8 + $0x3f8] sm:$0xff]
    %v1426 = vld [vmem:[%s6] sm:$0xff]
    %v1428 = vlaneseq
    %v1429 = vshrl.u32 %v1428, 7
    %v1430 = vsub.s32 0, %v1429
    %v1431 = vrot.slane %v1426, %v1430
    %v1432 = vlaneseq
    %v1433 = vshrl.u32 %v1432, 7
    %v1434 = vsub.s32 1, %v1433
    %v1435 = vrot.slane %v1426, %v1434
    %v1436 = vlaneseq
    %v1437 = vshrl.u32 %v1436, 7
    %v1438 = vsub.s32 2, %v1437
    %v1439 = vrot.slane %v1426, %v1438
    %v1440 = vlaneseq
    %v1441 = vshrl.u32 %v1440, 7
    %v1442 = vsub.s32 3, %v1441
    %v1443 = vrot.slane %v1426, %v1442
    %v1444 = vlaneseq
    %v1445 = vshrl.u32 %v1444, 7
    %v1446 = vsub.s32 4, %v1445
    %v1447 = vrot.slane %v1426, %v1446
    %v1448 = vlaneseq
    %v1449 = vshrl.u32 %v1448, 7
    %v1450 = vsub.s32 5, %v1449
    %v1451 = vrot.slane %v1426, %v1450
    %v1452 = vlaneseq
    %v1453 = vshrl.u32 %v1452, 7
    %v1454 = vsub.s32 6, %v1453
    %v1455 = vrot.slane %v1426, %v1454
    %v1456 = vlaneseq
    %v1457 = vshrl.u32 %v1456, 7
    %v1458 = vsub.s32 7, %v1457
    %v1459 = vrot.slane %v1426, %v1458
    %v1596 = vunpack.c.l.b16 %v1298
    %v1597 = vunpack.c.h.b16 %v1298
    %v1598 = vunpack.c.l.b16 %v1299
    %v1599 = vunpack.c.h.b16 %v1299
    %v1600 = vunpack.c.l.b16 %v1300
    %v1601 = vunpack.c.h.b16 %v1300
    %v1602 = vunpack.c.l.b16 %v1301
    %v1603 = vunpack.c.h.b16 %v1301
    %v1604 = vunpack.c.l.b16 %v1302
    %v1605 = vunpack.c.h.b16 %v1302
    %v1606 = vunpack.c.l.b16 %v1303
    %v1607 = vunpack.c.h.b16 %v1303
    %v1608 = vunpack.c.l.b16 %v1304
    %v1609 = vunpack.c.h.b16 %v1304
    %v1610 = vunpack.c.l.b16 %v1305
    %v1611 = vunpack.c.h.b16 %v1305
    %v1612 = vunpack.c.l.b16 %v1306
    %v1613 = vunpack.c.h.b16 %v1306
    %v1614 = vunpack.c.l.b16 %v1307
    %v1615 = vunpack.c.h.b16 %v1307
    %v1616 = vunpack.c.l.b16 %v1308
    %v1617 = vunpack.c.h.b16 %v1308
    %v1618 = vunpack.c.l.b16 %v1309
    %v1619 = vunpack.c.h.b16 %v1309
    %v1620 = vunpack.c.l.b16 %v1310
    %v1621 = vunpack.c.h.b16 %v1310
    %v1622 = vunpack.c.l.b16 %v1311
    %v1623 = vunpack.c.h.b16 %v1311
    %v1624 = vunpack.c.l.b16 %v1312
    %v1625 = vunpack.c.h.b16 %v1312
    %v1626 = vunpack.c.l.b16 %v1313
    %v1627 = vunpack.c.h.b16 %v1313
    %v1628 = vunpack.c.l.b16 %v1314
    %v1629 = vunpack.c.h.b16 %v1314
    %v1630 = vunpack.c.l.b16 %v1315
    %v1631 = vunpack.c.h.b16 %v1315
    %v1632 = vunpack.c.l.b16 %v1316
    %v1633 = vunpack.c.h.b16 %v1316
    %v1634 = vunpack.c.l.b16 %v1317
    %v1635 = vunpack.c.h.b16 %v1317
    %v1636 = vunpack.c.l.b16 %v1318
    %v1637 = vunpack.c.h.b16 %v1318
    %v1638 = vunpack.c.l.b16 %v1319
    %v1639 = vunpack.c.h.b16 %v1319
    %v1640 = vunpack.c.l.b16 %v1320
    %v1641 = vunpack.c.h.b16 %v1320
    %v1642 = vunpack.c.l.b16 %v1321
    %v1643 = vunpack.c.h.b16 %v1321
    %v1644 = vunpack.c.l.b16 %v1322
    %v1645 = vunpack.c.h.b16 %v1322
    %v1646 = vunpack.c.l.b16 %v1323
    %v1647 = vunpack.c.h.b16 %v1323
    %v1648 = vunpack.c.l.b16 %v1324
    %v1649 = vunpack.c.h.b16 %v1324
    %v1650 = vunpack.c.l.b16 %v1325
    %v1651 = vunpack.c.h.b16 %v1325
    %v1652 = vunpack.c.l.b16 %v1326
    %v1653 = vunpack.c.h.b16 %v1326
    %v1654 = vunpack.c.l.b16 %v1327
    %v1655 = vunpack.c.h.b16 %v1327
    %v1656 = vunpack.c.l.b16 %v1328
    %v1657 = vunpack.c.h.b16 %v1328
    %v1658 = vunpack.c.l.b16 %v1329
    %v1659 = vunpack.c.h.b16 %v1329
    %v1660 = vunpack.c.l.b16 %v1330
    %v1661 = vunpack.c.h.b16 %v1330
    %v1662 = vunpack.c.l.b16 %v1331
    %v1663 = vunpack.c.h.b16 %v1331
    %v1664 = vunpack.c.l.b16 %v1332
    %v1665 = vunpack.c.h.b16 %v1332
    %v1666 = vunpack.c.l.b16 %v1333
    %v1667 = vunpack.c.h.b16 %v1333
    %v1668 = vunpack.c.l.b16 %v1334
    %v1669 = vunpack.c.h.b16 %v1334
    %v1670 = vunpack.c.l.b16 %v1335
    %v1671 = vunpack.c.h.b16 %v1335
    %v1672 = vunpack.c.l.b16 %v1336
    %v1673 = vunpack.c.h.b16 %v1336
    %v1674 = vunpack.c.l.b16 %v1337
    %v1675 = vunpack.c.h.b16 %v1337
    %v1676 = vunpack.c.l.b16 %v1338
    %v1677 = vunpack.c.h.b16 %v1338
    %v1678 = vunpack.c.l.b16 %v1339
    %v1679 = vunpack.c.h.b16 %v1339
    %v1680 = vunpack.c.l.b16 %v1340
    %v1681 = vunpack.c.h.b16 %v1340
    %v1682 = vunpack.c.l.b16 %v1341
    %v1683 = vunpack.c.h.b16 %v1341
    %v1684 = vunpack.c.l.b16 %v1342
    %v1685 = vunpack.c.h.b16 %v1342
    %v1686 = vunpack.c.l.b16 %v1343
    %v1687 = vunpack.c.h.b16 %v1343
    %v1688 = vunpack.c.l.b16 %v1344
    %v1689 = vunpack.c.h.b16 %v1344
    %v1690 = vunpack.c.l.b16 %v1345
    %v1691 = vunpack.c.h.b16 %v1345
    %v1692 = vunpack.c.l.b16 %v1346
    %v1693 = vunpack.c.h.b16 %v1346
    %v1694 = vunpack.c.l.b16 %v1347
    %v1695 = vunpack.c.h.b16 %v1347
    %v1696 = vunpack.c.l.b16 %v1348
    %v1697 = vunpack.c.h.b16 %v1348
    %v1698 = vunpack.c.l.b16 %v1349
    %v1699 = vunpack.c.h.b16 %v1349
    %v1700 = vunpack.c.l.b16 %v1350
    %v1701 = vunpack.c.h.b16 %v1350
    %v1702 = vunpack.c.l.b16 %v1351
    %v1703 = vunpack.c.h.b16 %v1351
    %v1704 = vunpack.c.l.b16 %v1352
    %v1705 = vunpack.c.h.b16 %v1352
    %v1706 = vunpack.c.l.b16 %v1353
    %v1707 = vunpack.c.h.b16 %v1353
    %v1708 = vunpack.c.l.b16 %v1354
    %v1709 = vunpack.c.h.b16 %v1354
    %v1710 = vunpack.c.l.b16 %v1355
    %v1711 = vunpack.c.h.b16 %v1355
    %v1712 = vunpack.c.l.b16 %v1356
    %v1713 = vunpack.c.h.b16 %v1356
    %v1714 = vunpack.c.l.b16 %v1357
    %v1715 = vunpack.c.h.b16 %v1357
    %v1716 = vunpack.c.l.b16 %v1358
    %v1717 = vunpack.c.h.b16 %v1358
    %v1718 = vunpack.c.l.b16 %v1359
    %v1719 = vunpack.c.h.b16 %v1359
    %v1720 = vunpack.c.l.b16 %v1360
    %v1721 = vunpack.c.h.b16 %v1360
    %v1722 = vunpack.c.l.b16 %v1361
    %v1723 = vunpack.c.h.b16 %v1361
    %v1724 = vunpack.c.l.b16 %v1362
    %v1725 = vunpack.c.h.b16 %v1362
    %v1726 = vunpack.c.l.b16 %v1363
    %v1727 = vunpack.c.h.b16 %v1363
    %v1728 = vunpack.c.l.b16 %v1364
    %v1729 = vunpack.c.h.b16 %v1364
    %v1730 = vunpack.c.l.b16 %v1365
    %v1731 = vunpack.c.h.b16 %v1365
    %v1732 = vunpack.c.l.b16 %v1366
    %v1733 = vunpack.c.h.b16 %v1366
    %v1734 = vunpack.c.l.b16 %v1367
    %v1735 = vunpack.c.h.b16 %v1367
    %v1736 = vunpack.c.l.b16 %v1368
    %v1737 = vunpack.c.h.b16 %v1368
    %v1738 = vunpack.c.l.b16 %v1369
    %v1739 = vunpack.c.h.b16 %v1369
    %v1740 = vunpack.c.l.b16 %v1370
    %v1741 = vunpack.c.h.b16 %v1370
    %v1742 = vunpack.c.l.b16 %v1371
    %v1743 = vunpack.c.h.b16 %v1371
    %v1744 = vunpack.c.l.b16 %v1372
    %v1745 = vunpack.c.h.b16 %v1372
    %v1746 = vunpack.c.l.b16 %v1373
    %v1747 = vunpack.c.h.b16 %v1373
    %v1748 = vunpack.c.l.b16 %v1374
    %v1749 = vunpack.c.h.b16 %v1374
    %v1750 = vunpack.c.l.b16 %v1375
    %v1751 = vunpack.c.h.b16 %v1375
    %v1752 = vunpack.c.l.b16 %v1376
    %v1753 = vunpack.c.h.b16 %v1376
    %v1754 = vunpack.c.l.b16 %v1377
    %v1755 = vunpack.c.h.b16 %v1377
    %v1756 = vunpack.c.l.b16 %v1378
    %v1757 = vunpack.c.h.b16 %v1378
    %v1758 = vunpack.c.l.b16 %v1379
    %v1759 = vunpack.c.h.b16 %v1379
    %v1760 = vunpack.c.l.b16 %v1380
    %v1761 = vunpack.c.h.b16 %v1380
    %v1762 = vunpack.c.l.b16 %v1381
    %v1763 = vunpack.c.h.b16 %v1381
    %v1764 = vunpack.c.l.b16 %v1382
    %v1765 = vunpack.c.h.b16 %v1382
    %v1766 = vunpack.c.l.b16 %v1383
    %v1767 = vunpack.c.h.b16 %v1383
    %v1768 = vunpack.c.l.b16 %v1384
    %v1769 = vunpack.c.h.b16 %v1384
    %v1770 = vunpack.c.l.b16 %v1385
    %v1771 = vunpack.c.h.b16 %v1385
    %v1772 = vunpack.c.l.b16 %v1386
    %v1773 = vunpack.c.h.b16 %v1386
    %v1774 = vunpack.c.l.b16 %v1387
    %v1775 = vunpack.c.h.b16 %v1387
    %v1776 = vunpack.c.l.b16 %v1388
    %v1777 = vunpack.c.h.b16 %v1388
    %v1778 = vunpack.c.l.b16 %v1389
    %v1779 = vunpack.c.h.b16 %v1389
    %v1780 = vunpack.c.l.b16 %v1390
    %v1781 = vunpack.c.h.b16 %v1390
    %v1782 = vunpack.c.l.b16 %v1391
    %v1783 = vunpack.c.h.b16 %v1391
    %v1784 = vunpack.c.l.b16 %v1392
    %v1785 = vunpack.c.h.b16 %v1392
    %v1786 = vunpack.c.l.b16 %v1393
    %v1787 = vunpack.c.h.b16 %v1393
    %v1788 = vunpack.c.l.b16 %v1394
    %v1789 = vunpack.c.h.b16 %v1394
    %v1790 = vunpack.c.l.b16 %v1395
    %v1791 = vunpack.c.h.b16 %v1395
    %v1792 = vunpack.c.l.b16 %v1396
    %v1793 = vunpack.c.h.b16 %v1396
    %v1794 = vunpack.c.l.b16 %v1397
    %v1795 = vunpack.c.h.b16 %v1397
    %v1796 = vunpack.c.l.b16 %v1398
    %v1797 = vunpack.c.h.b16 %v1398
    %v1798 = vunpack.c.l.b16 %v1399
    %v1799 = vunpack.c.h.b16 %v1399
    %v1800 = vunpack.c.l.b16 %v1400
    %v1801 = vunpack.c.h.b16 %v1400
    %v1802 = vunpack.c.l.b16 %v1401
    %v1803 = vunpack.c.h.b16 %v1401
    %v1804 = vunpack.c.l.b16 %v1402
    %v1805 = vunpack.c.h.b16 %v1402
    %v1806 = vunpack.c.l.b16 %v1403
    %v1807 = vunpack.c.h.b16 %v1403
    %v1808 = vunpack.c.l.b16 %v1404
    %v1809 = vunpack.c.h.b16 %v1404
    %v1810 = vunpack.c.l.b16 %v1405
    %v1811 = vunpack.c.h.b16 %v1405
    %v1812 = vunpack.c.l.b16 %v1406
    %v1813 = vunpack.c.h.b16 %v1406
    %v1814 = vunpack.c.l.b16 %v1407
    %v1815 = vunpack.c.h.b16 %v1407
    %v1816 = vunpack.c.l.b16 %v1408
    %v1817 = vunpack.c.h.b16 %v1408
    %v1818 = vunpack.c.l.b16 %v1409
    %v1819 = vunpack.c.h.b16 %v1409
    %v1820 = vunpack.c.l.b16 %v1410
    %v1821 = vunpack.c.h.b16 %v1410
    %v1822 = vunpack.c.l.b16 %v1411
    %v1823 = vunpack.c.h.b16 %v1411
    %v1824 = vunpack.c.l.b16 %v1412
    %v1825 = vunpack.c.h.b16 %v1412
    %v1826 = vunpack.c.l.b16 %v1413
    %v1827 = vunpack.c.h.b16 %v1413
    %v1828 = vunpack.c.l.b16 %v1414
    %v1829 = vunpack.c.h.b16 %v1414
    %v1830 = vunpack.c.l.b16 %v1415
    %v1831 = vunpack.c.h.b16 %v1415
    %v1832 = vunpack.c.l.b16 %v1416
    %v1833 = vunpack.c.h.b16 %v1416
    %v1834 = vunpack.c.l.b16 %v1417
    %v1835 = vunpack.c.h.b16 %v1417
    %v1836 = vunpack.c.l.b16 %v1418
    %v1837 = vunpack.c.h.b16 %v1418
    %v1838 = vunpack.c.l.b16 %v1419
    %v1839 = vunpack.c.h.b16 %v1419
    %v1840 = vunpack.c.l.b16 %v1420
    %v1841 = vunpack.c.h.b16 %v1420
    %v1842 = vunpack.c.l.b16 %v1421
    %v1843 = vunpack.c.h.b16 %v1421
    %v1844 = vunpack.c.l.b16 %v1422
    %v1845 = vunpack.c.h.b16 %v1422
    %v1846 = vunpack.c.l.b16 %v1423
    %v1847 = vunpack.c.h.b16 %v1423
    %v1848 = vunpack.c.l.b16 %v1424
    %v1849 = vunpack.c.h.b16 %v1424
    %v1850 = vunpack.c.l.b16 %v1425
    %v1851 = vunpack.c.h.b16 %v1425
    %v1852 = vpack.c.b16 %v1604, %v1596
    %v1853 = vpack.c.b16 %v1605, %v1597
    %v1854 = vpack.c.b16 %v1606, %v1598
    %v1855 = vpack.c.b16 %v1607, %v1599
    %v1856 = vpack.c.b16 %v1608, %v1600
    %v1857 = vpack.c.b16 %v1609, %v1601
    %v1858 = vpack.c.b16 %v1610, %v1602
    %v1859 = vpack.c.b16 %v1611, %v1603
    %v1860 = vpack.c.b16 %v1620, %v1612
    %v1861 = vpack.c.b16 %v1621, %v1613
    %v1862 = vpack.c.b16 %v1622, %v1614
    %v1863 = vpack.c.b16 %v1623, %v1615
    %v1864 = vpack.c.b16 %v1624, %v1616
    %v1865 = vpack.c.b16 %v1625, %v1617
    %v1866 = vpack.c.b16 %v1626, %v1618
    %v1867 = vpack.c.b16 %v1627, %v1619
    %v1868 = vpack.c.b16 %v1636, %v1628
    %v1869 = vpack.c.b16 %v1637, %v1629
    %v1870 = vpack.c.b16 %v1638, %v1630
    %v1871 = vpack.c.b16 %v1639, %v1631
    %v1872 = vpack.c.b16 %v1640, %v1632
    %v1873 = vpack.c.b16 %v1641, %v1633
    %v1874 = vpack.c.b16 %v1642, %v1634
    %v1875 = vpack.c.b16 %v1643, %v1635
    %v1876 = vpack.c.b16 %v1652, %v1644
    %v1877 = vpack.c.b16 %v1653, %v1645
    %v1878 = vpack.c.b16 %v1654, %v1646
    %v1879 = vpack.c.b16 %v1655, %v1647
    %v1880 = vpack.c.b16 %v1656, %v1648
    %v1881 = vpack.c.b16 %v1657, %v1649
    %v1882 = vpack.c.b16 %v1658, %v1650
    %v1883 = vpack.c.b16 %v1659, %v1651
    %v1884 = vpack.c.b16 %v1668, %v1660
    %v1885 = vpack.c.b16 %v1669, %v1661
    %v1886 = vpack.c.b16 %v1670, %v1662
    %v1887 = vpack.c.b16 %v1671, %v1663
    %v1888 = vpack.c.b16 %v1672, %v1664
    %v1889 = vpack.c.b16 %v1673, %v1665
    %v1890 = vpack.c.b16 %v1674, %v1666
    %v1891 = vpack.c.b16 %v1675, %v1667
    %v1892 = vpack.c.b16 %v1684, %v1676
    %v1893 = vpack.c.b16 %v1685, %v1677
    %v1894 = vpack.c.b16 %v1686, %v1678
    %v1895 = vpack.c.b16 %v1687, %v1679
    %v1896 = vpack.c.b16 %v1688, %v1680
    %v1897 = vpack.c.b16 %v1689, %v1681
    %v1898 = vpack.c.b16 %v1690, %v1682
    %v1899 = vpack.c.b16 %v1691, %v1683
    %v1900 = vpack.c.b16 %v1700, %v1692
    %v1901 = vpack.c.b16 %v1701, %v1693
    %v1902 = vpack.c.b16 %v1702, %v1694
    %v1903 = vpack.c.b16 %v1703, %v1695
    %v1904 = vpack.c.b16 %v1704, %v1696
    %v1905 = vpack.c.b16 %v1705, %v1697
    %v1906 = vpack.c.b16 %v1706, %v1698
    %v1907 = vpack.c.b16 %v1707, %v1699
    %v1908 = vpack.c.b16 %v1716, %v1708
    %v1909 = vpack.c.b16 %v1717, %v1709
    %v1910 = vpack.c.b16 %v1718, %v1710
    %v1911 = vpack.c.b16 %v1719, %v1711
    %v1912 = vpack.c.b16 %v1720, %v1712
    %v1913 = vpack.c.b16 %v1721, %v1713
    %v1914 = vpack.c.b16 %v1722, %v1714
    %v1915 = vpack.c.b16 %v1723, %v1715
    %v1916 = vpack.c.b16 %v1732, %v1724
    %v1917 = vpack.c.b16 %v1733, %v1725
    %v1918 = vpack.c.b16 %v1734, %v1726
    %v1919 = vpack.c.b16 %v1735, %v1727
    %v1920 = vpack.c.b16 %v1736, %v1728
    %v1921 = vpack.c.b16 %v1737, %v1729
    %v1922 = vpack.c.b16 %v1738, %v1730
    %v1923 = vpack.c.b16 %v1739, %v1731
    %v1924 = vpack.c.b16 %v1748, %v1740
    %v1925 = vpack.c.b16 %v1749, %v1741
    %v1926 = vpack.c.b16 %v1750, %v1742
    %v1927 = vpack.c.b16 %v1751, %v1743
    %v1928 = vpack.c.b16 %v1752, %v1744
    %v1929 = vpack.c.b16 %v1753, %v1745
    %v1930 = vpack.c.b16 %v1754, %v1746
    %v1931 = vpack.c.b16 %v1755, %v1747
    %v1932 = vpack.c.b16 %v1764, %v1756
    %v1933 = vpack.c.b16 %v1765, %v1757
    %v1934 = vpack.c.b16 %v1766, %v1758
    %v1935 = vpack.c.b16 %v1767, %v1759
    %v1936 = vpack.c.b16 %v1768, %v1760
    %v1937 = vpack.c.b16 %v1769, %v1761
    %v1938 = vpack.c.b16 %v1770, %v1762
    %v1939 = vpack.c.b16 %v1771, %v1763
    %v1940 = vpack.c.b16 %v1780, %v1772
    %v1941 = vpack.c.b16 %v1781, %v1773
    %v1942 = vpack.c.b16 %v1782, %v1774
    %v1943 = vpack.c.b16 %v1783, %v1775
    %v1944 = vpack.c.b16 %v1784, %v1776
    %v1945 = vpack.c.b16 %v1785, %v1777
    %v1946 = vpack.c.b16 %v1786, %v1778
    %v1947 = vpack.c.b16 %v1787, %v1779
    %v1948 = vpack.c.b16 %v1796, %v1788
    %v1949 = vpack.c.b16 %v1797, %v1789
    %v1950 = vpack.c.b16 %v1798, %v1790
    %v1951 = vpack.c.b16 %v1799, %v1791
    %v1952 = vpack.c.b16 %v1800, %v1792
    %v1953 = vpack.c.b16 %v1801, %v1793
    %v1954 = vpack.c.b16 %v1802, %v1794
    %v1955 = vpack.c.b16 %v1803, %v1795
    %v1956 = vpack.c.b16 %v1812, %v1804
    %v1957 = vpack.c.b16 %v1813, %v1805
    %v1958 = vpack.c.b16 %v1814, %v1806
    %v1959 = vpack.c.b16 %v1815, %v1807
    %v1960 = vpack.c.b16 %v1816, %v1808
    %v1961 = vpack.c.b16 %v1817, %v1809
    %v1962 = vpack.c.b16 %v1818, %v1810
    %v1963 = vpack.c.b16 %v1819, %v1811
    %v1964 = vpack.c.b16 %v1828, %v1820
    %v1965 = vpack.c.b16 %v1829, %v1821
    %v1966 = vpack.c.b16 %v1830, %v1822
    %v1967 = vpack.c.b16 %v1831, %v1823
    %v1968 = vpack.c.b16 %v1832, %v1824
    %v1969 = vpack.c.b16 %v1833, %v1825
    %v1970 = vpack.c.b16 %v1834, %v1826
    %v1971 = vpack.c.b16 %v1835, %v1827
    %v1972 = vpack.c.b16 %v1844, %v1836
    %v1973 = vpack.c.b16 %v1845, %v1837
    %v1974 = vpack.c.b16 %v1846, %v1838
    %v1975 = vpack.c.b16 %v1847, %v1839
    %v1976 = vpack.c.b16 %v1848, %v1840
    %v1977 = vpack.c.b16 %v1849, %v1841
    %v1978 = vpack.c.b16 %v1850, %v1842
    %v1979 = vpack.c.b16 %v1851, %v1843
    %2108 = vmatprep.subr.bf16.mxu0 %v1853
    %2109 = vmatpush1.bf16.msra.mxu0 %v1852
    %2110 = vmatprep.subr.bf16.mxu0 %v1861
    %2111 = vmatpush1.bf16.msra.mxu0 %v1860
    %2112 = vmatprep.subr.bf16.mxu0 %v1869
    %2113 = vmatpush1.bf16.msra.mxu0 %v1868
    %2114 = vmatprep.subr.bf16.mxu0 %v1877
    %2115 = vmatpush1.bf16.msra.mxu0 %v1876
    %2116 = vmatprep.subr.bf16.mxu0 %v1885
    %2117 = vmatpush1.bf16.msra.mxu0 %v1884
    %2118 = vmatprep.subr.bf16.mxu0 %v1893
    %2119 = vmatpush1.bf16.msra.mxu0 %v1892
    %2120 = vmatprep.subr.bf16.mxu0 %v1901
    %2121 = vmatpush1.bf16.msra.mxu0 %v1900
    %2122 = vmatprep.subr.bf16.mxu0 %v1909
    %2123 = vmatpush1.bf16.msra.mxu0 %v1908
    %2124 = vmatprep.subr.bf16.mxu0 %v1917
    %2125 = vmatpush1.bf16.msra.mxu0 %v1916
    %2126 = vmatprep.subr.bf16.mxu0 %v1925
    %2127 = vmatpush1.bf16.msra.mxu0 %v1924
    %2128 = vmatprep.subr.bf16.mxu0 %v1933
    %2129 = vmatpush1.bf16.msra.mxu0 %v1932
    %2130 = vmatprep.subr.bf16.mxu0 %v1941
    %2131 = vmatpush1.bf16.msra.mxu0 %v1940
    %2132 = vmatprep.subr.bf16.mxu0 %v1949
    %2133 = vmatpush1.bf16.msra.mxu0 %v1948
    %2134 = vmatprep.subr.bf16.mxu0 %v1957
    %2135 = vmatpush1.bf16.msra.mxu0 %v1956
    %2136 = vmatprep.subr.bf16.mxu0 %v1965
    %2137 = vmatpush1.bf16.msra.mxu0 %v1964
    %2138 = vmatprep.subr.bf16.mxu0 %v1973
    %2139 = vmatpush1.bf16.msra.mxu0 %v1972
    %2140 = vmatprep.mubr.bf16.mxu0 %v1297
    %2141 = vmatmul.mubr.bf16.gmra.mrb[0].mxu0 %v1296
    %v2142 = vpop.f32.mrb[0].mxu0
    %v2143 = vadd.f32 %v1431, %v2142
    %v2144 = vpop.f32.mrb[0].mxu0
    %v2145 = vadd.f32 %v1435, %v2144
    %v2146 = vpop.f32.mrb[0].mxu0
    %v2147 = vpop.f32.mrb[0].mxu0
    %2148 = vdwg.mxu0
    %2149 = vmatprep.subr.bf16.mxu0 %v1855
    %2150 = vmatpush1.bf16.msra.mxu0 %v1854
    %2151 = vmatprep.subr.bf16.mxu0 %v1863
    %2152 = vmatpush1.bf16.msra.mxu0 %v1862
    %2153 = vmatprep.subr.bf16.mxu0 %v1871
    %2154 = vmatpush1.bf16.msra.mxu0 %v1870
    %2155 = vmatprep.subr.bf16.mxu0 %v1879
    %2156 = vmatpush1.bf16.msra.mxu0 %v1878
    %2157 = vmatprep.subr.bf16.mxu0 %v1887
    %2158 = vmatpush1.bf16.msra.mxu0 %v1886
    %2159 = vmatprep.subr.bf16.mxu0 %v1895
    %2160 = vmatpush1.bf16.msra.mxu0 %v1894
    %2161 = vmatprep.subr.bf16.mxu0 %v1903
    %2162 = vmatpush1.bf16.msra.mxu0 %v1902
    %2163 = vmatprep.subr.bf16.mxu0 %v1911
    %2164 = vmatpush1.bf16.msra.mxu0 %v1910
    %2165 = vmatprep.subr.bf16.mxu0 %v1919
    %2166 = vmatpush1.bf16.msra.mxu0 %v1918
    %2167 = vmatprep.subr.bf16.mxu0 %v1927
    %2168 = vmatpush1.bf16.msra.mxu0 %v1926
    %2169 = vmatprep.subr.bf16.mxu0 %v1935
    %2170 = vmatpush1.bf16.msra.mxu0 %v1934
    %2171 = vmatprep.subr.bf16.mxu0 %v1943
    %2172 = vmatpush1.bf16.msra.mxu0 %v1942
    %2173 = vmatprep.subr.bf16.mxu0 %v1951
    %2174 = vmatpush1.bf16.msra.mxu0 %v1950
    %2175 = vmatprep.subr.bf16.mxu0 %v1959
    %2176 = vmatpush1.bf16.msra.mxu0 %v1958
    %2177 = vmatprep.subr.bf16.mxu0 %v1967
    %2178 = vmatpush1.bf16.msra.mxu0 %v1966
    %2179 = vmatprep.subr.bf16.mxu0 %v1975
    %2180 = vmatpush1.bf16.msra.mxu0 %v1974
    %2181 = vmatprep.mubr.bf16.mxu0 %v1297
    %2182 = vmatmul.mubr.bf16.gmra.mrb[0].mxu0 %v1296
    %v2183 = vpop.f32.mrb[0].mxu0
    %v2184 = vadd.f32 %v1439, %v2183
    %v2185 = vpop.f32.mrb[0].mxu0
    %v2186 = vadd.f32 %v1443, %v2185
    %v2187 = vpop.f32.mrb[0].mxu0
    %v2188 = vpop.f32.mrb[0].mxu0
    %2189 = vdwg.mxu0
    %2190 = vmatprep.subr.bf16.mxu0 %v1857
    %2191 = vmatpush1.bf16.msra.mxu0 %v1856
    %2192 = vmatprep.subr.bf16.mxu0 %v1865
    %2193 = vmatpush1.bf16.msra.mxu0 %v1864
    %2194 = vmatprep.subr.bf16.mxu0 %v1873
    %2195 = vmatpush1.bf16.msra.mxu0 %v1872
    %2196 = vmatprep.subr.bf16.mxu0 %v1881
    %2197 = vmatpush1.bf16.msra.mxu0 %v1880
    %2198 = vmatprep.subr.bf16.mxu0 %v1889
    %2199 = vmatpush1.bf16.msra.mxu0 %v1888
    %2200 = vmatprep.subr.bf16.mxu0 %v1897
    %2201 = vmatpush1.bf16.msra.mxu0 %v1896
    %2202 = vmatprep.subr.bf16.mxu0 %v1905
    %2203 = vmatpush1.bf16.msra.mxu0 %v1904
    %2204 = vmatprep.subr.bf16.mxu0 %v1913
    %2205 = vmatpush1.bf16.msra.mxu0 %v1912
    %2206 = vmatprep.subr.bf16.mxu0 %v1921
    %2207 = vmatpush1.bf16.msra.mxu0 %v1920
    %2208 = vmatprep.subr.bf16.mxu0 %v1929
    %2209 = vmatpush1.bf16.msra.mxu0 %v1928
    %2210 = vmatprep.subr.bf16.mxu0 %v1937
    %2211 = vmatpush1.bf16.msra.mxu0 %v1936
    %2212 = vmatprep.subr.bf16.mxu0 %v1945
    %2213 = vmatpush1.bf16.msra.mxu0 %v1944
    %2214 = vmatprep.subr.bf16.mxu0 %v1953
    %2215 = vmatpush1.bf16.msra.mxu0 %v1952
    %2216 = vmatprep.subr.bf16.mxu0 %v1961
    %2217 = vmatpush1.bf16.msra.mxu0 %v1960
    %2218 = vmatprep.subr.bf16.mxu0 %v1969
    %2219 = vmatpush1.bf16.msra.mxu0 %v1968
    %2220 = vmatprep.subr.bf16.mxu0 %v1977
    %2221 = vmatpush1.bf16.msra.mxu0 %v1976
    %2222 = vmatprep.mubr.bf16.mxu0 %v1297
    %2223 = vmatmul.mubr.bf16.gmra.mrb[0].mxu0 %v1296
    %v2224 = vpop.f32.mrb[0].mxu0
    %v2225 = vadd.f32 %v1447, %v2224
    %v2226 = vpop.f32.mrb[0].mxu0
    %v2227 = vadd.f32 %v1451, %v2226
    %v2228 = vpop.f32.mrb[0].mxu0
    %v2229 = vpop.f32.mrb[0].mxu0
    %2230 = vdwg.mxu0
    %2231 = vmatprep.subr.bf16.mxu0 %v1859
    %2232 = vmatpush1.bf16.msra.mxu0 %v1858
    %2233 = vmatprep.subr.bf16.mxu0 %v1867
    %2234 = vmatpush1.bf16.msra.mxu0 %v1866
    %2235 = vmatprep.subr.bf16.mxu0 %v1875
    %2236 = vmatpush1.bf16.msra.mxu0 %v1874
    %2237 = vmatprep.subr.bf16.mxu0 %v1883
    %2238 = vmatpush1.bf16.msra.mxu0 %v1882
    %2239 = vmatprep.subr.bf16.mxu0 %v1891
    %2240 = vmatpush1.bf16.msra.mxu0 %v1890
    %2241 = vmatprep.subr.bf16.mxu0 %v1899
    %2242 = vmatpush1.bf16.msra.mxu0 %v1898
    %2243 = vmatprep.subr.bf16.mxu0 %v1907
    %2244 = vmatpush1.bf16.msra.mxu0 %v1906
    %2245 = vmatprep.subr.bf16.mxu0 %v1915
    %2246 = vmatpush1.bf16.msra.mxu0 %v1914
    %2247 = vmatprep.subr.bf16.mxu0 %v1923
    %2248 = vmatpush1.bf16.msra.mxu0 %v1922
    %2249 = vmatprep.subr.bf16.mxu0 %v1931
    %2250 = vmatpush1.bf16.msra.mxu0 %v1930
    %2251 = vmatprep.subr.bf16.mxu0 %v1939
    %2252 = vmatpush1.bf16.msra.mxu0 %v1938
    %2253 = vmatprep.subr.bf16.mxu0 %v1947
    %2254 = vmatpush1.bf16.msra.mxu0 %v1946
    %2255 = vmatprep.subr.bf16.mxu0 %v1955
    %2256 = vmatpush1.bf16.msra.mxu0 %v1954
    %2257 = vmatprep.subr.bf16.mxu0 %v1963
    %2258 = vmatpush1.bf16.msra.mxu0 %v1962
    %2259 = vmatprep.subr.bf16.mxu0 %v1971
    %2260 = vmatpush1.bf16.msra.mxu0 %v1970
    %2261 = vmatprep.subr.bf16.mxu0 %v1979
    %2262 = vmatpush1.bf16.msra.mxu0 %v1978
    %2263 = vmatprep.mubr.bf16.mxu0 %v1297
    %2264 = vmatmul.mubr.bf16.gmra.mrb[0].mxu0 %v1296
    %v2265 = vpop.f32.mrb[0].mxu0
    %v2266 = vadd.f32 %v1455, %v2265
    %v2267 = vpop.f32.mrb[0].mxu0
    %v2268 = vadd.f32 %v1459, %v2267
    %v2269 = vpop.f32.mrb[0].mxu0
    %v2270 = vpop.f32.mrb[0].mxu0
    %2271 = vdwg.mxu0
    %v2272 = vlaneseq
    %v2273 = vand.u32 %v2272, 127
    %v2274 = vadd.s32 %v2273, 128
    %v2275 = vadd.s32 %v2273, 256
    %v2276 = vadd.s32 %v2273, 384
    %v2277 = vadd.s32 %v2273, 512
    %v2278 = vadd.s32 %v2273, 640
    %v2279 = vadd.s32 %v2273, 768
    %v2280 = vadd.s32 %v2273, 896
    %v2281 = vmax.f32 %v2143, %v2225
    %v2282 = vmax.f32 %v2145, %v2227
    %v2283 = vmax.f32 %v2184, %v2266
    %v2284 = vmax.f32 %v2186, %v2268
    %v2285 = vmax.f32 %v2281, %v2282
    %v2286 = vmax.f32 %v2283, %v2284
    %v2287 = vmax.f32 %v2285, %v2286
    %2288 = vmax.xlane.f32.xlu0 %v2287
    %v2289 = vpop.xlane.xlu0 %2288
    %v2290 = vsub.f32 %v2143, %v2289
    %v2291 = vsub.f32 %v2145, %v2289
    %v2292 = vsub.f32 %v2184, %v2289
    %v2293 = vsub.f32 %v2186, %v2289
    %v2294 = vsub.f32 %v2225, %v2289
    %v2295 = vsub.f32 %v2227, %v2289
    %v2296 = vsub.f32 %v2266, %v2289
    %v2297 = vsub.f32 %v2268, %v2289
    %v2298 = vmul.f32 %v2290, 1.442695
    %v2299 = vpow.pop %v2298
    %v2300 = vmul.f32 %v2291, 1.442695
    %v2301 = vpow.pop %v2300
    %v2302 = vmul.f32 %v2292, 1.442695
    %v2303 = vpow.pop %v2302
    %v2304 = vmul.f32 %v2293, 1.442695
    %v2305 = vpow.pop %v2304
    %v2306 = vmul.f32 %v2294, 1.442695
    %v2307 = vpow.pop %v2306
    %v2308 = vmul.f32 %v2295, 1.442695
    %v2309 = vpow.pop %v2308
    %v2310 = vmul.f32 %v2296, 1.442695
    %v2311 = vpow.pop %v2310
    %v2312 = vmul.f32 %v2297, 1.442695
    %v2313 = vpow.pop %v2312
    %v2314 = vadd.f32 %v2299, %v2301
    %v2315 = vadd.f32 %v2314, %v2303
    %v2316 = vadd.f32 %v2315, %v2305
    %v2317 = vadd.f32 %v2316, %v2307
    %v2318 = vadd.f32 %v2317, %v2309
    %v2319 = vadd.f32 %v2318, %v2311
    %v2320 = vadd.f32 %v2319, %v2313
    %2321 = vadd.xlane.f32.xlu0 %v2320
    %v2322 = vpop.xlane.xlu0 %2321
    %v2323 = vlog2.pop %v2322
    %v2324 = vmul.f32 %v2323, 0.6931472
    %v2325 = vadd.f32 %v2289, %v2324
    %v2326 = vld [vmem:[%s7] sm:$0xff]
    %2327 = vset.pattern.permute.xlu0 0
    %2328 = vperm.xlu0 %2327, %v2326
    %v2329 = vpop.permute.xlu0 %2328
    %vm2330 = vcmp.eq.s32.totalorder %v2273, %v2329
    %vm2331 = vcmp.eq.s32.totalorder %v2274, %v2329
    %vm2332 = vcmp.eq.s32.totalorder %v2275, %v2329
    %vm2333 = vcmp.eq.s32.totalorder %v2276, %v2329
    %vm2334 = vcmp.eq.s32.totalorder %v2277, %v2329
    %vm2335 = vcmp.eq.s32.totalorder %v2278, %v2329
    %vm2336 = vcmp.eq.s32.totalorder %v2279, %v2329
    %vm2337 = vcmp.eq.s32.totalorder %v2280, %v2329
    %v2338 = vsel %vm2330, %v2143, 0.0
    %v2339 = vsel %vm2331, %v2145, 0.0
    %v2340 = vsel %vm2332, %v2184, 0.0
    %v2341 = vsel %vm2333, %v2186, 0.0
    %v2342 = vsel %vm2334, %v2225, 0.0
    %v2343 = vsel %vm2335, %v2227, 0.0
    %v2344 = vsel %vm2336, %v2266, 0.0
    %v2345 = vsel %vm2337, %v2268, 0.0
    %v2346 = vadd.f32 %v2338, %v2339
    %v2347 = vadd.f32 %v2346, %v2340
    %v2348 = vadd.f32 %v2347, %v2341
    %v2349 = vadd.f32 %v2348, %v2342
    %v2350 = vadd.f32 %v2349, %v2343
    %v2351 = vadd.f32 %v2350, %v2344
    %v2352 = vadd.f32 %v2351, %v2345
    %2353 = vadd.xlane.f32.xlu0 %v2352
    %v2354 = vpop.xlane.xlu0 %2353
    %v2355 = vsub.f32 %v2325, %v2354
    %vm2356 = vcmask 7168
    %2357 = vst.msk [vmem:[%s8] sm:$0xff] %vm2356, %v2355
    %vm2358 = vcmp.eq.f32.partialorder %v2143, %v2289
    %vm2359 = vcmp.eq.f32.partialorder %v2145, %v2289
    %vm2360 = vcmp.eq.f32.partialorder %v2184, %v2289
    %vm2361 = vcmp.eq.f32.partialorder %v2186, %v2289
    %vm2362 = vcmp.eq.f32.partialorder %v2225, %v2289
    %vm2363 = vcmp.eq.f32.partialorder %v2227, %v2289
    %vm2364 = vcmp.eq.f32.partialorder %v2266, %v2289
    %vm2365 = vcmp.eq.f32.partialorder %v2268, %v2289
    %v2366 = vsel %vm2358, %v2273, 1024
    %v2367 = vsel %vm2359, %v2274, 1024
    %v2368 = vsel %vm2360, %v2275, 1024
    %v2369 = vsel %vm2361, %v2276, 1024
    %v2370 = vsel %vm2362, %v2277, 1024
    %v2371 = vsel %vm2363, %v2278, 1024
    %v2372 = vsel %vm2364, %v2279, 1024
    %v2373 = vsel %vm2365, %v2280, 1024
    %vm2374 = vcmp.lt.s32.totalorder %v2366, %v2370
    %v2375 = vsel %vm2374, %v2366, %v2370
    %vm2376 = vcmp.lt.s32.totalorder %v2367, %v2371
    %v2377 = vsel %vm2376, %v2367, %v2371
    %vm2378 = vcmp.lt.s32.totalorder %v2368, %v2372
    %v2379 = vsel %vm2378, %v2368, %v2372
    %vm2380 = vcmp.lt.s32.totalorder %v2369, %v2373
    %v2381 = vsel %vm2380, %v2369, %v2373
    %vm2382 = vcmp.lt.s32.totalorder %v2375, %v2377
    %v2383 = vsel %vm2382, %v2375, %v2377
    %vm2384 = vcmp.lt.s32.totalorder %v2379, %v2381
    %v2385 = vsel %vm2384, %v2379, %v2381
    %vm2386 = vcmp.lt.s32.totalorder %v2383, %v2385
    %v2387 = vsel %vm2386, %v2383, %v2385
    %v2388 = vand.u32 %v2387, 65535
    %v2389 = vshra.s32 %v2387, 16
    %v2390 = vcvt.s32.f32 %v2388
    %v2391 = vcvt.s32.f32 %v2389
    %2392 = vmin.xlane.f32.xlu0 %v2391
    %v2393 = vpop.xlane.xlu0 %2392
    %vm2394 = vcmp.eq.f32.partialorder %v2391, %v2393
    %v2395 = vsel %vm2394, %v2390, inf
    %2396 = vmin.xlane.f32.xlu0 %v2395
    %v2397 = vpop.xlane.xlu0 %2396
    %v2398 = vcvt.f32.s32 %v2397
    %v2399 = vcvt.f32.s32 %v2393
    %v2400 = vshll.u32 %v2399, 16
    %v2401 = vadd.s32 %v2400, %v2398
    %vm2402 = vcmp.eq.s32.totalorder %v2273, %v2401
    %vm2403 = vcmp.eq.s32.totalorder %v2274, %v2401
    %vm2404 = vcmp.eq.s32.totalorder %v2275, %v2401
    %vm2405 = vcmp.eq.s32.totalorder %v2276, %v2401
    %vm2406 = vcmp.eq.s32.totalorder %v2277, %v2401
    %vm2407 = vcmp.eq.s32.totalorder %v2278, %v2401
    %vm2408 = vcmp.eq.s32.totalorder %v2279, %v2401
    %vm2409 = vcmp.eq.s32.totalorder %v2280, %v2401
    %v2410 = vsel %vm2402, -3e+38, %v2143
    %v2411 = vsel %vm2403, -3e+38, %v2145
    %v2412 = vsel %vm2404, -3e+38, %v2184
    %v2413 = vsel %vm2405, -3e+38, %v2186
    %v2414 = vsel %vm2406, -3e+38, %v2225
    %v2415 = vsel %vm2407, -3e+38, %v2227
    %v2416 = vsel %vm2408, -3e+38, %v2266
    %v2417 = vsel %vm2409, -3e+38, %v2268
    %v2418 = vmax.f32 %v2410, %v2414
    %v2419 = vmax.f32 %v2411, %v2415
    %v2420 = vmax.f32 %v2412, %v2416
    %v2421 = vmax.f32 %v2413, %v2417
    %v2422 = vmax.f32 %v2418, %v2419
    %v2423 = vmax.f32 %v2420, %v2421
    %v2424 = vmax.f32 %v2422, %v2423
    %2425 = vmax.xlane.f32.xlu0 %v2424
    %v2426 = vpop.xlane.xlu0 %2425
    %vm2427 = vcmp.eq.f32.partialorder %v2410, %v2426
    %vm2428 = vcmp.eq.f32.partialorder %v2411, %v2426
    %vm2429 = vcmp.eq.f32.partialorder %v2412, %v2426
    %vm2430 = vcmp.eq.f32.partialorder %v2413, %v2426
    %vm2431 = vcmp.eq.f32.partialorder %v2414, %v2426
    %vm2432 = vcmp.eq.f32.partialorder %v2415, %v2426
    %vm2433 = vcmp.eq.f32.partialorder %v2416, %v2426
    %vm2434 = vcmp.eq.f32.partialorder %v2417, %v2426
    %v2435 = vsel %vm2427, %v2273, 1024
    %v2436 = vsel %vm2428, %v2274, 1024
    %v2437 = vsel %vm2429, %v2275, 1024
    %v2438 = vsel %vm2430, %v2276, 1024
    %v2439 = vsel %vm2431, %v2277, 1024
    %v2440 = vsel %vm2432, %v2278, 1024
    %v2441 = vsel %vm2433, %v2279, 1024
    %v2442 = vsel %vm2434, %v2280, 1024
    %vm2443 = vcmp.lt.s32.totalorder %v2435, %v2439
    %v2444 = vsel %vm2443, %v2435, %v2439
    %vm2445 = vcmp.lt.s32.totalorder %v2436, %v2440
    %v2446 = vsel %vm2445, %v2436, %v2440
    %vm2447 = vcmp.lt.s32.totalorder %v2437, %v2441
    %v2448 = vsel %vm2447, %v2437, %v2441
    %vm2449 = vcmp.lt.s32.totalorder %v2438, %v2442
    %v2450 = vsel %vm2449, %v2438, %v2442
    %vm2451 = vcmp.lt.s32.totalorder %v2444, %v2446
    %v2452 = vsel %vm2451, %v2444, %v2446
    %vm2453 = vcmp.lt.s32.totalorder %v2448, %v2450
    %v2454 = vsel %vm2453, %v2448, %v2450
    %vm2455 = vcmp.lt.s32.totalorder %v2452, %v2454
    %v2456 = vsel %vm2455, %v2452, %v2454
    %v2457 = vand.u32 %v2456, 65535
    %v2458 = vshra.s32 %v2456, 16
    %v2459 = vcvt.s32.f32 %v2457
    %v2460 = vcvt.s32.f32 %v2458
    %2461 = vmin.xlane.f32.xlu0 %v2460
    %v2462 = vpop.xlane.xlu0 %2461
    %vm2463 = vcmp.eq.f32.partialorder %v2460, %v2462
    %v2464 = vsel %vm2463, %v2459, inf
    %2465 = vmin.xlane.f32.xlu0 %v2464
    %v2466 = vpop.xlane.xlu0 %2465
    %v2467 = vcvt.f32.s32 %v2466
    %v2468 = vcvt.f32.s32 %v2462
    %v2469 = vshll.u32 %v2468, 16
    %v2470 = vadd.s32 %v2469, %v2467
    %vm2471 = vcmp.eq.s32.totalorder %v2273, %v2470
    %vm2472 = vcmp.eq.s32.totalorder %v2274, %v2470
    %vm2473 = vcmp.eq.s32.totalorder %v2275, %v2470
    %vm2474 = vcmp.eq.s32.totalorder %v2276, %v2470
    %vm2475 = vcmp.eq.s32.totalorder %v2277, %v2470
    %vm2476 = vcmp.eq.s32.totalorder %v2278, %v2470
    %vm2477 = vcmp.eq.s32.totalorder %v2279, %v2470
    %vm2478 = vcmp.eq.s32.totalorder %v2280, %v2470
    %v2479 = vsel %vm2471, -3e+38, %v2410
    %v2480 = vsel %vm2472, -3e+38, %v2411
    %v2481 = vsel %vm2473, -3e+38, %v2412
    %v2482 = vsel %vm2474, -3e+38, %v2413
    %v2483 = vsel %vm2475, -3e+38, %v2414
    %v2484 = vsel %vm2476, -3e+38, %v2415
    %v2485 = vsel %vm2477, -3e+38, %v2416
    %v2486 = vsel %vm2478, -3e+38, %v2417
    %v2487 = vmax.f32 %v2479, %v2483
    %v2488 = vmax.f32 %v2480, %v2484
    %v2489 = vmax.f32 %v2481, %v2485
    %v2490 = vmax.f32 %v2482, %v2486
    %v2491 = vmax.f32 %v2487, %v2488
    %v2492 = vmax.f32 %v2489, %v2490
    %v2493 = vmax.f32 %v2491, %v2492
    %2494 = vmax.xlane.f32.xlu0 %v2493
    %v2495 = vpop.xlane.xlu0 %2494
    %vm2496 = vcmp.eq.f32.partialorder %v2479, %v2495
    %vm2497 = vcmp.eq.f32.partialorder %v2480, %v2495
    %vm2498 = vcmp.eq.f32.partialorder %v2481, %v2495
    %vm2499 = vcmp.eq.f32.partialorder %v2482, %v2495
    %vm2500 = vcmp.eq.f32.partialorder %v2483, %v2495
    %vm2501 = vcmp.eq.f32.partialorder %v2484, %v2495
    %vm2502 = vcmp.eq.f32.partialorder %v2485, %v2495
    %vm2503 = vcmp.eq.f32.partialorder %v2486, %v2495
    %v2504 = vsel %vm2496, %v2273, 1024
    %v2505 = vsel %vm2497, %v2274, 1024
    %v2506 = vsel %vm2498, %v2275, 1024
    %v2507 = vsel %vm2499, %v2276, 1024
    %v2508 = vsel %vm2500, %v2277, 1024
    %v2509 = vsel %vm2501, %v2278, 1024
    %v2510 = vsel %vm2502, %v2279, 1024
    %v2511 = vsel %vm2503, %v2280, 1024
    %vm2512 = vcmp.lt.s32.totalorder %v2504, %v2508
    %v2513 = vsel %vm2512, %v2504, %v2508
    %vm2514 = vcmp.lt.s32.totalorder %v2505, %v2509
    %v2515 = vsel %vm2514, %v2505, %v2509
    %vm2516 = vcmp.lt.s32.totalorder %v2506, %v2510
    %v2517 = vsel %vm2516, %v2506, %v2510
    %vm2518 = vcmp.lt.s32.totalorder %v2507, %v2511
    %v2519 = vsel %vm2518, %v2507, %v2511
    %vm2520 = vcmp.lt.s32.totalorder %v2513, %v2515
    %v2521 = vsel %vm2520, %v2513, %v2515
    %vm2522 = vcmp.lt.s32.totalorder %v2517, %v2519
    %v2523 = vsel %vm2522, %v2517, %v2519
    %vm2524 = vcmp.lt.s32.totalorder %v2521, %v2523
    %v2525 = vsel %vm2524, %v2521, %v2523
    %v2526 = vand.u32 %v2525, 65535
    %v2527 = vshra.s32 %v2525, 16
    %v2528 = vcvt.s32.f32 %v2526
    %v2529 = vcvt.s32.f32 %v2527
    %2530 = vmin.xlane.f32.xlu0 %v2529
    %v2531 = vpop.xlane.xlu0 %2530
    %vm2532 = vcmp.eq.f32.partialorder %v2529, %v2531
    %v2533 = vsel %vm2532, %v2528, inf
    %2534 = vmin.xlane.f32.xlu0 %v2533
    %v2535 = vpop.xlane.xlu0 %2534
    %v2536 = vcvt.f32.s32 %v2535
    %v2537 = vcvt.f32.s32 %v2531
    %v2538 = vshll.u32 %v2537, 16
    %v2539 = vadd.s32 %v2538, %v2536
    %vm2540 = vcmp.eq.s32.totalorder %v2273, %v2539
    %vm2541 = vcmp.eq.s32.totalorder %v2274, %v2539
    %vm2542 = vcmp.eq.s32.totalorder %v2275, %v2539
    %vm2543 = vcmp.eq.s32.totalorder %v2276, %v2539
    %vm2544 = vcmp.eq.s32.totalorder %v2277, %v2539
    %vm2545 = vcmp.eq.s32.totalorder %v2278, %v2539
    %vm2546 = vcmp.eq.s32.totalorder %v2279, %v2539
    %vm2547 = vcmp.eq.s32.totalorder %v2280, %v2539
    %v2548 = vsel %vm2540, -3e+38, %v2479
    %v2549 = vsel %vm2541, -3e+38, %v2480
    %v2550 = vsel %vm2542, -3e+38, %v2481
    %v2551 = vsel %vm2543, -3e+38, %v2482
    %v2552 = vsel %vm2544, -3e+38, %v2483
    %v2553 = vsel %vm2545, -3e+38, %v2484
    %v2554 = vsel %vm2546, -3e+38, %v2485
    %v2555 = vsel %vm2547, -3e+38, %v2486
    %v2556 = vmax.f32 %v2548, %v2552
    %v2557 = vmax.f32 %v2549, %v2553
    %v2558 = vmax.f32 %v2550, %v2554
    %v2559 = vmax.f32 %v2551, %v2555
    %v2560 = vmax.f32 %v2556, %v2557
    %v2561 = vmax.f32 %v2558, %v2559
    %v2562 = vmax.f32 %v2560, %v2561
    %2563 = vmax.xlane.f32.xlu0 %v2562
    %v2564 = vpop.xlane.xlu0 %2563
    %vm2565 = vcmp.eq.f32.partialorder %v2548, %v2564
    %vm2566 = vcmp.eq.f32.partialorder %v2549, %v2564
    %vm2567 = vcmp.eq.f32.partialorder %v2550, %v2564
    %vm2568 = vcmp.eq.f32.partialorder %v2551, %v2564
    %vm2569 = vcmp.eq.f32.partialorder %v2552, %v2564
    %vm2570 = vcmp.eq.f32.partialorder %v2553, %v2564
    %vm2571 = vcmp.eq.f32.partialorder %v2554, %v2564
    %vm2572 = vcmp.eq.f32.partialorder %v2555, %v2564
    %v2573 = vsel %vm2565, %v2273, 1024
    %v2574 = vsel %vm2566, %v2274, 1024
    %v2575 = vsel %vm2567, %v2275, 1024
    %v2576 = vsel %vm2568, %v2276, 1024
    %v2577 = vsel %vm2569, %v2277, 1024
    %v2578 = vsel %vm2570, %v2278, 1024
    %v2579 = vsel %vm2571, %v2279, 1024
    %v2580 = vsel %vm2572, %v2280, 1024
    %vm2581 = vcmp.lt.s32.totalorder %v2573, %v2577
    %v2582 = vsel %vm2581, %v2573, %v2577
    %vm2583 = vcmp.lt.s32.totalorder %v2574, %v2578
    %v2584 = vsel %vm2583, %v2574, %v2578
    %vm2585 = vcmp.lt.s32.totalorder %v2575, %v2579
    %v2586 = vsel %vm2585, %v2575, %v2579
    %vm2587 = vcmp.lt.s32.totalorder %v2576, %v2580
    %v2588 = vsel %vm2587, %v2576, %v2580
    %vm2589 = vcmp.lt.s32.totalorder %v2582, %v2584
    %v2590 = vsel %vm2589, %v2582, %v2584
    %vm2591 = vcmp.lt.s32.totalorder %v2586, %v2588
    %v2592 = vsel %vm2591, %v2586, %v2588
    %vm2593 = vcmp.lt.s32.totalorder %v2590, %v2592
    %v2594 = vsel %vm2593, %v2590, %v2592
    %v2595 = vand.u32 %v2594, 65535
    %v2596 = vshra.s32 %v2594, 16
    %v2597 = vcvt.s32.f32 %v2595
    %v2598 = vcvt.s32.f32 %v2596
    %2599 = vmin.xlane.f32.xlu0 %v2598
    %v2600 = vpop.xlane.xlu0 %2599
    %vm2601 = vcmp.eq.f32.partialorder %v2598, %v2600
    %v2602 = vsel %vm2601, %v2597, inf
    %2603 = vmin.xlane.f32.xlu0 %v2602
    %v2604 = vpop.xlane.xlu0 %2603
    %v2605 = vcvt.f32.s32 %v2604
    %v2606 = vcvt.f32.s32 %v2600
    %v2607 = vshll.u32 %v2606, 16
    %v2608 = vadd.s32 %v2607, %v2605
    %vm2609 = vcmp.eq.s32.totalorder %v2273, %v2608
    %vm2610 = vcmp.eq.s32.totalorder %v2274, %v2608
    %vm2611 = vcmp.eq.s32.totalorder %v2275, %v2608
    %vm2612 = vcmp.eq.s32.totalorder %v2276, %v2608
    %vm2613 = vcmp.eq.s32.totalorder %v2277, %v2608
    %vm2614 = vcmp.eq.s32.totalorder %v2278, %v2608
    %vm2615 = vcmp.eq.s32.totalorder %v2279, %v2608
    %vm2616 = vcmp.eq.s32.totalorder %v2280, %v2608
    %v2617 = vsel %vm2609, -3e+38, %v2548
    %v2618 = vsel %vm2610, -3e+38, %v2549
    %v2619 = vsel %vm2611, -3e+38, %v2550
    %v2620 = vsel %vm2612, -3e+38, %v2551
    %v2621 = vsel %vm2613, -3e+38, %v2552
    %v2622 = vsel %vm2614, -3e+38, %v2553
    %v2623 = vsel %vm2615, -3e+38, %v2554
    %v2624 = vsel %vm2616, -3e+38, %v2555
    %v2625 = vmax.f32 %v2617, %v2621
    %v2626 = vmax.f32 %v2618, %v2622
    %v2627 = vmax.f32 %v2619, %v2623
    %v2628 = vmax.f32 %v2620, %v2624
    %v2629 = vmax.f32 %v2625, %v2626
    %v2630 = vmax.f32 %v2627, %v2628
    %v2631 = vmax.f32 %v2629, %v2630
    %2632 = vmax.xlane.f32.xlu0 %v2631
    %v2633 = vpop.xlane.xlu0 %2632
    %vm2634 = vcmp.eq.f32.partialorder %v2617, %v2633
    %vm2635 = vcmp.eq.f32.partialorder %v2618, %v2633
    %vm2636 = vcmp.eq.f32.partialorder %v2619, %v2633
    %vm2637 = vcmp.eq.f32.partialorder %v2620, %v2633
    %vm2638 = vcmp.eq.f32.partialorder %v2621, %v2633
    %vm2639 = vcmp.eq.f32.partialorder %v2622, %v2633
    %vm2640 = vcmp.eq.f32.partialorder %v2623, %v2633
    %vm2641 = vcmp.eq.f32.partialorder %v2624, %v2633
    %v2642 = vsel %vm2634, %v2273, 1024
    %v2643 = vsel %vm2635, %v2274, 1024
    %v2644 = vsel %vm2636, %v2275, 1024
    %v2645 = vsel %vm2637, %v2276, 1024
    %v2646 = vsel %vm2638, %v2277, 1024
    %v2647 = vsel %vm2639, %v2278, 1024
    %v2648 = vsel %vm2640, %v2279, 1024
    %v2649 = vsel %vm2641, %v2280, 1024
    %vm2650 = vcmp.lt.s32.totalorder %v2642, %v2646
    %v2651 = vsel %vm2650, %v2642, %v2646
    %vm2652 = vcmp.lt.s32.totalorder %v2643, %v2647
    %v2653 = vsel %vm2652, %v2643, %v2647
    %vm2654 = vcmp.lt.s32.totalorder %v2644, %v2648
    %v2655 = vsel %vm2654, %v2644, %v2648
    %vm2656 = vcmp.lt.s32.totalorder %v2645, %v2649
    %v2657 = vsel %vm2656, %v2645, %v2649
    %vm2658 = vcmp.lt.s32.totalorder %v2651, %v2653
    %v2659 = vsel %vm2658, %v2651, %v2653
    %vm2660 = vcmp.lt.s32.totalorder %v2655, %v2657
    %v2661 = vsel %vm2660, %v2655, %v2657
    %vm2662 = vcmp.lt.s32.totalorder %v2659, %v2661
    %v2663 = vsel %vm2662, %v2659, %v2661
    %v2664 = vand.u32 %v2663, 65535
    %v2665 = vshra.s32 %v2663, 16
    %v2666 = vcvt.s32.f32 %v2664
    %v2667 = vcvt.s32.f32 %v2665
    %2668 = vmin.xlane.f32.xlu0 %v2667
    %v2669 = vpop.xlane.xlu0 %2668
    %vm2670 = vcmp.eq.f32.partialorder %v2667, %v2669
    %v2671 = vsel %vm2670, %v2666, inf
    %2672 = vmin.xlane.f32.xlu0 %v2671
    %v2673 = vpop.xlane.xlu0 %2672
    %v2674 = vcvt.f32.s32 %v2673
    %v2675 = vcvt.f32.s32 %v2669
    %v2676 = vshll.u32 %v2675, 16
    %v2677 = vadd.s32 %v2676, %v2674
    %vm2678 = vcmp.eq.s32.totalorder %v2273, 0
    %v2679 = vsel %vm2678, %v2401, 0
    %vm2680 = vcmp.eq.s32.totalorder %v2273, 1
    %v2681 = vsel %vm2680, %v2470, %v2679
    %vm2682 = vcmp.eq.s32.totalorder %v2273, 2
    %v2683 = vsel %vm2682, %v2539, %v2681
    %vm2684 = vcmp.eq.s32.totalorder %v2273, 3
    %v2685 = vsel %vm2684, %v2608, %v2683
    %vm2686 = vcmp.eq.s32.totalorder %v2273, 4
    %v2687 = vsel %vm2686, %v2677, %v2685
    %vm2688 = vcmask 39936
    %2689 = vst.msk [vmem:[#allocation10] sm:$0xff] %vm2688, %v2687
    // Predicated region
    $region50: #{spotter_forward.1} parent=1 // pred_check
      _
    $region51: #{spotter_forward.1} parent=1 // pred_check_branch
      %2691 = sbr.rel (0) target = $region53
    $region52: #{spotter_forward.1} parent=1 // pred_region
      _
    $region53: #{spotter_forward.1} parent=1 // pred_fallthru
      _
    // Predicated region
    $region54: #{spotter_forward.1} parent=1 // pred_check
      _
    $region55: #{spotter_forward.1} parent=1 // pred_check_branch
      %2693 = sbr.rel (0) target = $region57
    $region56: #{spotter_forward.1} parent=1 // pred_region
      %s2695 = ssub.s32 128, 128
      %2696 = vsyncadd [#allocation4], %s2695
      %s2698 = sshll.u32 [#allocation10], 4
      %s2699 = int_to_ptr.vmem [resolvable:$true] %s2698
      %2701 = dma.vmem_to_hbm [thread:$0]  %s2699, 128, %s9, [#allocation4]
    $region57: #{spotter_forward.1} parent=1 // pred_fallthru
      _
    // Predicated region
    $region58: #{spotter_forward.1} parent=1 // pred_check
      _
    $region59: #{spotter_forward.1} parent=1 // pred_check_branch
      %2703 = sbr.rel (0) target = $region61
    $region60: #{spotter_forward.1} parent=1 // pred_region
      _
    $region61: #{spotter_forward.1} parent=1 // pred_fallthru
      _
    // Predicated region
    $region62: #{spotter_forward.1} parent=1 // pred_check
      _
    $region63: #{spotter_forward.1} parent=1 // pred_check_branch
      %2705 = sbr.rel (0) target = $region65
    $region64: #{spotter_forward.1} parent=1 // pred_region
      %2706 = dma.done [#allocation4], 128
    $region65: #{spotter_forward.1} parent=1 // pred_fallthru
      _
    %2707 = vsyncpa [#allocation3], 1
    %2708 = vsyncpa [#allocation6], 1
    %2709 = vsyncpa [#allocation9], 1
    %2710 = vsyncpa [#allocation4], 1

</llo_original>
